<compile_context>
chip_gen: v7x
topology: tpu7x:2x2x1
jax: 0.10.0
libtpu: 0.0.40
codegen_flags: <defaults>
</compile_context>

<pallas_src>
import math
from functools import partial

import jax
import jax.numpy as jnp
import numpy as np
from jax.experimental import pallas as pl
from jax.experimental.pallas import tpu as pltpu

_LANE = 128   # lane width
_SUB = 8      # sublane width


def _round_up(v, m):
    return (v + m - 1) // m * m


def _vmem_capacity_bytes(default=64 * 1024 * 1024):
    """Physical VMEM per core, with a conservative (v7x-safe) fallback."""
    try:
        info = pltpu.get_tpu_info()
        cap = getattr(info, "vmem_capacity_bytes", None)
        if cap:
            return int(cap)
    except Exception:
        pass
    return default


def mlp_kernel(xm_ref, xt_ref, xb_ref, w1_ref, b1_ref, kw_ref, kb_ref,
               w2_ref, b2_ref, o_ref, pad_ref, *, W, Hb, pad_top):
    """One grid step = one batch element x one band of Hb image rows.

    xm_ref : (1, Hb*W, Cin_p)  bf16  main band (flat tokens)
    xt_ref : (1, 1, W, Cin_p)  bf16  image row above the band (clamped at r=0)
    xb_ref : (1, 1, W, Cin_p)  bf16  image row below the band (clamped at last)
    o_ref  : (1, Hb*W, Cout_p)
    pad_ref: VMEM f32 scratch (pad_top + (Hb+2)*W + 8, Hd_p)
    """
    r = pl.program_id(1)
    nb = pl.num_programs(1)
    band_n = Hb * W
    halo_n = band_n + 2 * W
    hd_p = pad_ref.shape[1]

    w1 = w1_ref[...]
    b1 = b1_ref[...]

    # ---------- fc1 (MXU, bf16 x bf16 -> f32 accumulation) ----------
    h_main = jnp.dot(xm_ref[0], w1, preferred_element_type=jnp.float32) + b1
    h_top = jnp.dot(xt_ref[0, 0], w1, preferred_element_type=jnp.float32) + b1
    h_bot = jnp.dot(xb_ref[0, 0], w1, preferred_element_type=jnp.float32) + b1

    # ---------- stage [top row | band | bottom row] into the scratch ----------
    pad_ref[pad_top:pad_top + W, :] = h_top
    pad_ref[pad_top + W:pad_top + W + band_n, :] = h_main
    pad_ref[pad_top + W + band_n:pad_top + halo_n, :] = h_bot

    # Conv zero-padding lives in h-space: halo rows outside the image must be
    # zero (fc1(0) = b1 != 0), so overwrite them at the image boundaries.
    @pl.when(r == 0)
    def _():
        pad_ref[pad_top:pad_top + W, :] = jnp.zeros((W, hd_p), jnp.float32)

    @pl.when(r == nb - 1)
    def _():
        pad_ref[pad_top + W + band_n:pad_top + halo_n, :] = jnp.zeros(
            (W, hd_p), jnp.float32)

    # (Guard rows before/after the staged region are never written: every read
    #  that lands there is masked by the dx column masks below.)

    # ---------- depthwise 3x3 conv: 9 static slices, masks grouped per dx ----
    def tap(dy, dx):
        s = pad_top + (1 + dy) * W + dx            # static offset
        return pad_ref[s:s + band_n, :]

    def kw_(dy, dx):                               # (1, Hd_p)
        return kw_ref[dy + 1, dx + 1:dx + 2, :]

    col = jax.lax.broadcasted_iota(jnp.int32, (band_n, 1), 0) % W
    not_first = col != 0                           # dx = -1 valid
    not_last = col != (W - 1)                      # dx = +1 valid

    acc = kb_ref[...] + (tap(-1, 0) * kw_(-1, 0)
                         + tap(0, 0) * kw_(0, 0)
                         + tap(1, 0) * kw_(1, 0))
    right = (tap(-1, 1) * kw_(-1, 1)
             + tap(0, 1) * kw_(0, 1)
             + tap(1, 1) * kw_(1, 1))
    left = (tap(-1, -1) * kw_(-1, -1)
            + tap(0, -1) * kw_(0, -1)
            + tap(1, -1) * kw_(1, -1))
    acc = acc + jnp.where(not_last, right, 0.0) + jnp.where(not_first, left, 0.0)

    # ---------- GELU (exact erf, matches nn.GELU default); dropout p=0 ------
    a = 0.5 * acc * (1.0 + jax.lax.erf(acc * (1.0 / math.sqrt(2.0))))

    # ---------- fc2 (MXU, bf16 x bf16 -> f32 accumulation) ----------
    out = jnp.dot(a.astype(jnp.bfloat16), w2_ref[...],
                  preferred_element_type=jnp.float32) + b2_ref[...]
    o_ref[0] = out.astype(o_ref.dtype)


def _choose_band_rows(B, H, W, cin_p, hd_p, cout_p, vmem_cap):
    """Largest divisor of H whose per-step working set fits the chip budget;
    prefers a grid with >= 2 steps so both v7x TensorCores get work."""
    budget = int(0.70 * vmem_cap)
    weights = (2 * 2 * (cin_p * hd_p + hd_p * cout_p)      # bf16 w1/w2, dbl-buffered
               + 4 * (9 * hd_p + 2 * hd_p + 2 * cout_p))   # f32 kw/kb/b1/b2
    pad_top = (-W) % _SUB or _SUB

    def per_step(hb):
        band_n = hb * W
        halo_n = band_n + 2 * W
        return (2 * (band_n + 2 * W) * cin_p * 2            # dbl-buffered bf16 x
                + 2 * band_n * cout_p * 4                   # dbl-buffered f32 out
                + (pad_top + halo_n + _SUB) * hd_p * 4      # conv scratch
                + 8 * band_n * hd_p * 4                     # live f32 intermediates
                + band_n * cout_p * 4)                      # fc2 result

    cands = [hb for hb in range(1, H + 1)
             if H % hb == 0 and ((hb * W) % _SUB == 0 or hb == H)]
    fitting = [hb for hb in cands if weights + per_step(hb) <= budget]
    if not fitting:
        return min(cands)
    multi = [hb for hb in fitting if B * (H // hb) >= 2]
    return max(multi) if multi else max(fitting)


def mlp_pallas(x, params, H, W, band_rows=None):
    """x: (B, N, Cin) with N = H*W (row-major, matching the PyTorch module)."""
    B, N, Cin = x.shape
    assert N == H * W
    w1, b1, kw, kb, w2, b2 = (params["w1"], params["b1"], params["kw"],
                              params["kb"], params["w2"], params["b2"])
    Hd = w1.shape[1]
    Cout = w2.shape[1]

    # ----- lane-dense channel padding (zeros => numerically exact) -----
    Cin_p = _round_up(Cin, _LANE)
    Hd_p = _round_up(Hd, _LANE)
    Cout_p = _round_up(Cout, _LANE)

    w1_p = jnp.pad(w1, ((0, Cin_p - Cin), (0, Hd_p - Hd))).astype(jnp.bfloat16)
    b1_p = jnp.pad(b1, ((0, 0), (0, Hd_p - Hd)))
    kw_p = jnp.pad(kw, ((0, 0), (0, 0), (0, Hd_p - Hd)))
    kb_p = jnp.pad(kb, ((0, 0), (0, Hd_p - Hd)))
    w2_p = jnp.pad(w2, ((0, Hd_p - Hd), (0, Cout_p - Cout))).astype(jnp.bfloat16)
    b2_p = jnp.pad(b2, ((0, 0), (0, Cout_p - Cout)))

    # host-side bf16 cast of the activation (fc1 consumes bf16 anyway)
    x_p = jnp.pad(x, ((0, 0), (0, 0), (0, Cin_p - Cin))).astype(jnp.bfloat16)
    x_img = x_p.reshape(B, H, W, Cin_p)        # free view used for halo rows

    vmem_cap = _vmem_capacity_bytes()
    if band_rows is None:
        band_rows = _choose_band_rows(B, H, W, Cin_p, Hd_p, Cout_p, vmem_cap)
    Hb = band_rows
    assert H % Hb == 0, "band_rows must divide H"
    nb = H // Hb
    assert (Hb * W) % _SUB == 0 or nb == 1, \
        "band_rows*W must be a multiple of 8 (or use a single band)"
    # TODO(synk): ragged last band (H not divisible) would need per-band
    # boundary-row masking; currently such shapes fall back to nb == 1.

    band_n = Hb * W
    pad_top = (-W) % _SUB or _SUB              # keeps the main-band store 8-aligned
    pad_rows = pad_top + (Hb + 2) * W + _SUB

    kernel = partial(mlp_kernel, W=W, Hb=Hb, pad_top=pad_top)

    flops = 2 * B * N * Hd_p * (Cin_p + Cout_p) + 18 * B * N * Hd_p
    cost = pl.CostEstimate(
        flops=int(flops),
        transcendentals=int(B * N * Hd_p),
        bytes_accessed=int(x_p.size * 2 + B * N * Cout_p * 4
                           + 2 * (Cin_p * Hd_p + Hd_p * Cout_p)))

    out_p = pl.pallas_call(
        kernel,
        out_shape=jax.ShapeDtypeStruct((B, N, Cout_p), x.dtype),
        grid_spec=pltpu.PrefetchScalarGridSpec(
            num_scalar_prefetch=0,
            grid=(B, nb),
            in_specs=[
                # main band (flat tokens)
                pl.BlockSpec((1, band_n, Cin_p), lambda b, r: (b, r, 0)),
                # 1-row halo above (clamped; zeroed in-kernel at r == 0)
                pl.BlockSpec((1, 1, W, Cin_p),
                             lambda b, r: (b, jnp.maximum(r * Hb - 1, 0), 0, 0)),
                # 1-row halo below (clamped; zeroed in-kernel at r == nb-1)
                pl.BlockSpec((1, 1, W, Cin_p),
                             lambda b, r: (b, jnp.minimum((r + 1) * Hb, H - 1), 0, 0)),
                pl.BlockSpec((Cin_p, Hd_p), lambda b, r: (0, 0)),
                pl.BlockSpec((1, Hd_p), lambda b, r: (0, 0)),
                pl.BlockSpec((3, 3, Hd_p), lambda b, r: (0, 0, 0)),
                pl.BlockSpec((1, Hd_p), lambda b, r: (0, 0)),
                pl.BlockSpec((Hd_p, Cout_p), lambda b, r: (0, 0)),
                pl.BlockSpec((1, Cout_p), lambda b, r: (0, 0)),
            ],
            out_specs=pl.BlockSpec((1, band_n, Cout_p), lambda b, r: (b, r, 0)),
            scratch_shapes=[pltpu.VMEM((pad_rows, Hd_p), jnp.float32)],
        ),
        compiler_params=pltpu.CompilerParams(
            dimension_semantics=("parallel", "parallel"),
            vmem_limit_bytes=int(0.85 * vmem_cap)),
        cost_estimate=cost,
    )(x_p, x_img, x_img, w1_p, b1_p, kw_p, kb_p, w2_p, b2_p)

    return out_p[:, :, :Cout]


def mlp_reference(x, params, H, W):
    """Pure-JAX f32 reference of the same forward (sanity check)."""
    w1, b1, kw, kb, w2, b2 = (params["w1"], params["b1"], params["kw"],
                              params["kb"], params["w2"], params["b2"])
    B, N, _ = x.shape
    Hd = w1.shape[1]
    h = x @ w1 + b1                                            # (B, N, Hd)
    hw = h.reshape(B, H, W, Hd)
    hw_p = jnp.pad(hw, ((0, 0), (1, 1), (1, 1), (0, 0)))
    acc = jnp.zeros_like(hw) + kb
    for dy in (-1, 0, 1):
        for dx in (-1, 0, 1):
            acc = acc + hw_p[:, 1 + dy:1 + dy + H, 1 + dx:1 + dx + W, :] \
                        * kw[dy + 1, dx + 1, :]
    a = 0.5 * acc * (1.0 + jax.lax.erf(acc / math.sqrt(2.0)))
    a = a.reshape(B, N, Hd)
    return a @ w2 + b2


def init_params(key, in_features, hidden_features, out_features):
    k1, k2, k3 = jax.random.split(key, 3)
    # nn.Linear weights: trunc_normal std=0.02 (a=-2, b=2), bias = 0.
    w1 = (jax.random.truncated_normal(k1, -2.0, 2.0,
                                      (in_features, hidden_features),
                                      jnp.float32) * 0.02)
    b1 = jnp.zeros((1, hidden_features), jnp.float32)
    w2 = (jax.random.truncated_normal(k2, -2.0, 2.0,
                                      (hidden_features, out_features),
                                      jnp.float32) * 0.02)
    b2 = jnp.zeros((1, out_features), jnp.float32)
    # Depthwise Conv2d(hidden, hidden, 3, groups=hidden):
    # fan_out = 3*3*hidden/hidden = 9  ->  std = sqrt(2/9); bias = 0.
    kw = (jax.random.normal(k3, (3, 3, hidden_features), jnp.float32)
          * math.sqrt(2.0 / 9.0))
    kb = jnp.zeros((1, hidden_features), jnp.float32)
    return {"w1": w1, "b1": b1, "kw": kw, "kb": kb, "w2": w2, "b2": b2}


if __name__ == "__main__":
    B, Hsp, Wsp = 2, 8, 8
    in_features, hidden_features = 16, 32
    out_features = in_features            # module default: out = in
    N = Hsp * Wsp

    key = jax.random.PRNGKey(0)
    kx, kp = jax.random.split(key)
    x = jax.random.normal(kx, (B, N, in_features), jnp.float32)
    params = init_params(kp, in_features, hidden_features, out_features)

    ref = jax.block_until_ready(mlp_reference(x, params, Hsp, Wsp))

    # multi-band path (exercises the halo specs and boundary zeroing)
    out = jax.block_until_ready(mlp_pallas(x, params, Hsp, Wsp, band_rows=4))
    np.testing.assert_allclose(np.asarray(out), np.asarray(ref),
                               rtol=2e-2, atol=2e-3)

    # auto band selection (single band per batch element at this toy size)
    out2 = jax.block_until_ready(mlp_pallas(x, params, Hsp, Wsp))
    np.testing.assert_allclose(np.asarray(out2), np.asarray(ref),
                               rtol=2e-2, atol=2e-3)

    print("KERNEL_OK")
</pallas_src>

<mosaic_0001>
module attributes {stable_mosaic.version = 11 : i64} {
  func.func @mlp_kernel(%arg0: i32, %arg1: i32, %arg2: memref<1x32x128xbf16, #tpu.memory_space<vmem>>, %arg3: memref<1x1x8x128xbf16, #tpu.memory_space<vmem>>, %arg4: memref<1x1x8x128xbf16, #tpu.memory_space<vmem>>, %arg5: memref<128x128xbf16, #tpu.memory_space<vmem>>, %arg6: memref<1x128xf32, #tpu.memory_space<vmem>>, %arg7: memref<3x3x128xf32, #tpu.memory_space<vmem>>, %arg8: memref<1x128xf32, #tpu.memory_space<vmem>>, %arg9: memref<128x128xbf16, #tpu.memory_space<vmem>>, %arg10: memref<1x128xf32, #tpu.memory_space<vmem>>, %arg11: memref<1x32x128xf32, #tpu.memory_space<vmem>>, %arg12: memref<64x128xf32, #tpu.memory_space<vmem>>) attributes {dimension_semantics = [#tpu.dimension_semantics<parallel>, #tpu.dimension_semantics<parallel>], iteration_bounds = array<i64: 2, 2>, scalar_prefetch = 0 : i64, scratch_operands = 1 : i64, tpu.core_type = #tpu.core_type<tc>, window_params = [{transform_indices = @transform_0, window_bounds = array<i64: 1, 32, 128>}, {transform_indices = @transform_1, window_bounds = array<i64: 1, 1, 8, 128>}, {transform_indices = @transform_2, window_bounds = array<i64: 1, 1, 8, 128>}, {pipeline_mode = #tpu.pipeline_mode<synchronous>, transform_indices = @transform_3, window_bounds = array<i64: 128, 128>}, {pipeline_mode = #tpu.pipeline_mode<synchronous>, transform_indices = @transform_4, window_bounds = array<i64: 1, 128>}, {pipeline_mode = #tpu.pipeline_mode<synchronous>, transform_indices = @transform_5, window_bounds = array<i64: 3, 3, 128>}, {pipeline_mode = #tpu.pipeline_mode<synchronous>, transform_indices = @transform_6, window_bounds = array<i64: 1, 128>}, {pipeline_mode = #tpu.pipeline_mode<synchronous>, transform_indices = @transform_7, window_bounds = array<i64: 128, 128>}, {pipeline_mode = #tpu.pipeline_mode<synchronous>, transform_indices = @transform_8, window_bounds = array<i64: 1, 128>}, {transform_indices = @transform_9, window_bounds = array<i64: 1, 32, 128>}]} {
    %c0 = arith.constant 0 : index
    %c0_0 = arith.constant 0 : index
    %0 = vector.load %arg5[%c0, %c0_0] : memref<128x128xbf16, #tpu.memory_space<vmem>>, vector<128x128xbf16>
    %c0_1 = arith.constant 0 : index
    %c0_2 = arith.constant 0 : index
    %1 = vector.load %arg6[%c0_1, %c0_2] : memref<1x128xf32, #tpu.memory_space<vmem>>, vector<1x128xf32>
    %c0_3 = arith.constant 0 : index
    %c0_4 = arith.constant 0 : index
    %c0_5 = arith.constant 0 : index
    %2 = vector.load %arg2[%c0_3, %c0_4, %c0_5] : memref<1x32x128xbf16, #tpu.memory_space<vmem>>, vector<1x32x128xbf16>
    %3 = vector.shape_cast %2 : vector<1x32x128xbf16> to vector<32x128xbf16>
    %cst = arith.constant dense<0.000000e+00> : vector<32x128xf32>
    %4 = tpu.matmul %3, %0, %cst {dimension_numbers = #tpu.dot_dimension_numbers<[1], [0], [0], [1], [0, 0, 1, 1], [], []>} : vector<32x128xbf16>, vector<128x128xbf16>, vector<32x128xf32> -> vector<32x128xf32>
    %5 = vector.broadcast %1 : vector<1x128xf32> to vector<32x128xf32>
    %6 = arith.addf %4, %5 : vector<32x128xf32>
    %c0_6 = arith.constant 0 : index
    %c0_7 = arith.constant 0 : index
    %c0_8 = arith.constant 0 : index
    %c0_9 = arith.constant 0 : index
    %7 = vector.load %arg3[%c0_6, %c0_7, %c0_8, %c0_9] : memref<1x1x8x128xbf16, #tpu.memory_space<vmem>>, vector<1x1x8x128xbf16>
    %8 = vector.shape_cast %7 : vector<1x1x8x128xbf16> to vector<8x128xbf16>
    %cst_10 = arith.constant dense<0.000000e+00> : vector<8x128xf32>
    %9 = tpu.matmul %8, %0, %cst_10 {dimension_numbers = #tpu.dot_dimension_numbers<[1], [0], [0], [1], [0, 0, 1, 1], [], []>} : vector<8x128xbf16>, vector<128x128xbf16>, vector<8x128xf32> -> vector<8x128xf32>
    %10 = vector.broadcast %1 : vector<1x128xf32> to vector<8x128xf32>
    %11 = arith.addf %9, %10 : vector<8x128xf32>
    %c0_11 = arith.constant 0 : index
    %c0_12 = arith.constant 0 : index
    %c0_13 = arith.constant 0 : index
    %c0_14 = arith.constant 0 : index
    %12 = vector.load %arg4[%c0_11, %c0_12, %c0_13, %c0_14] : memref<1x1x8x128xbf16, #tpu.memory_space<vmem>>, vector<1x1x8x128xbf16>
    %13 = vector.shape_cast %12 : vector<1x1x8x128xbf16> to vector<8x128xbf16>
    %cst_15 = arith.constant dense<0.000000e+00> : vector<8x128xf32>
    %14 = tpu.matmul %13, %0, %cst_15 {dimension_numbers = #tpu.dot_dimension_numbers<[1], [0], [0], [1], [0, 0, 1, 1], [], []>} : vector<8x128xbf16>, vector<128x128xbf16>, vector<8x128xf32> -> vector<8x128xf32>
    %15 = vector.broadcast %1 : vector<1x128xf32> to vector<8x128xf32>
    %16 = arith.addf %14, %15 : vector<8x128xf32>
    %c8 = arith.constant 8 : index
    %c0_16 = arith.constant 0 : index
    %17 = vector.load %arg12[%c8, %c0_16] : memref<64x128xf32, #tpu.memory_space<vmem>>, vector<8x128xf32>
    tpu.vector_store %arg12[%c8, %c0_16], %11 {strides = array<i32>} : memref<64x128xf32, #tpu.memory_space<vmem>>, vector<8x128xf32>,
    %c16 = arith.constant 16 : index
    %c0_17 = arith.constant 0 : index
    %18 = vector.load %arg12[%c16, %c0_17] : memref<64x128xf32, #tpu.memory_space<vmem>>, vector<32x128xf32>
    tpu.vector_store %arg12[%c16, %c0_17], %6 {strides = array<i32>} : memref<64x128xf32, #tpu.memory_space<vmem>>, vector<32x128xf32>,
    %c48 = arith.constant 48 : index
    %c0_18 = arith.constant 0 : index
    %19 = vector.load %arg12[%c48, %c0_18] : memref<64x128xf32, #tpu.memory_space<vmem>>, vector<8x128xf32>
    tpu.vector_store %arg12[%c48, %c0_18], %16 {strides = array<i32>} : memref<64x128xf32, #tpu.memory_space<vmem>>, vector<8x128xf32>,
    %c0_i32 = arith.constant 0 : i32
    %20 = arith.cmpi eq, %arg1, %c0_i32 : i32
    %21 = arith.extui %20 : i1 to i32
    %c0_i32_19 = arith.constant 0 : i32
    %22 = arith.cmpi ne, %21, %c0_i32_19 : i32
    scf.if %22 {
      %cst_78 = arith.constant 0.000000e+00 : f32
      %128 = vector.broadcast %cst_78 : f32 to vector<8x128xf32>
      %c8_79 = arith.constant 8 : index
      %c0_80 = arith.constant 0 : index
      %129 = vector.load %arg12[%c8_79, %c0_80] : memref<64x128xf32, #tpu.memory_space<vmem>>, vector<8x128xf32>
      tpu.vector_store %arg12[%c8_79, %c0_80], %128 {strides = array<i32>} : memref<64x128xf32, #tpu.memory_space<vmem>>, vector<8x128xf32>,
    } else {
    }
    %c1_i32 = arith.constant 1 : i32
    %23 = arith.cmpi eq, %arg1, %c1_i32 : i32
    %24 = arith.extui %23 : i1 to i32
    %c0_i32_20 = arith.constant 0 : i32
    %25 = arith.cmpi ne, %24, %c0_i32_20 : i32
    scf.if %25 {
      %cst_78 = arith.constant 0.000000e+00 : f32
      %128 = vector.broadcast %cst_78 : f32 to vector<8x128xf32>
      %c48_79 = arith.constant 48 : index
      %c0_80 = arith.constant 0 : index
      %129 = vector.load %arg12[%c48_79, %c0_80] : memref<64x128xf32, #tpu.memory_space<vmem>>, vector<8x128xf32>
      tpu.vector_store %arg12[%c48_79, %c0_80], %128 {strides = array<i32>} : memref<64x128xf32, #tpu.memory_space<vmem>>, vector<8x128xf32>,
    } else {
    }
    %26 = tpu.iota {dimensions = array<i32: 0>} : vector<32x1xi32>
    %c8_i32 = arith.constant 8 : i32
    %c0_i32_21 = arith.constant 0 : i32
    %27 = arith.cmpi eq, %c8_i32, %c0_i32_21 : i32
    %c1_i32_22 = arith.constant 1 : i32
    %28 = arith.select %27, %c1_i32_22, %c8_i32 : i32
    %29 = vector.broadcast %28 : i32 to vector<32x1xi32>
    %30 = arith.remsi %26, %29 : vector<32x1xi32>
    %c0_i32_23 = arith.constant 0 : i32
    %31 = vector.broadcast %c0_i32_23 : i32 to vector<32x1xi32>
    %32 = arith.cmpi ne, %30, %31 : vector<32x1xi32>
    %c0_i32_24 = arith.constant 0 : i32
    %33 = vector.broadcast %c0_i32_24 : i32 to vector<32x1xi32>
    %34 = arith.cmpi slt, %30, %33 : vector<32x1xi32>
    %c0_i32_25 = arith.constant 0 : i32
    %35 = arith.cmpi slt, %28, %c0_i32_25 : i32
    %36 = vector.broadcast %35 : i1 to vector<32x1xi1>
    %37 = vector.broadcast %36 : vector<32x1xi1> to vector<32x1xi1>
    %38 = arith.xori %34, %37 : vector<32x1xi1>
    %39 = arith.andi %38, %32 : vector<32x1xi1>
    %40 = vector.broadcast %28 : i32 to vector<32x1xi32>
    %41 = arith.addi %30, %40 : vector<32x1xi32>
    %42 = arith.select %39, %41, %30 : vector<32x1xi1>, vector<32x1xi32>
    %c0_i32_26 = arith.constant 0 : i32
    %43 = vector.broadcast %c0_i32_26 : i32 to vector<32x1xi32>
    %44 = arith.cmpi ne, %42, %43 : vector<32x1xi32>
    %c7_i32 = arith.constant 7 : i32
    %45 = vector.broadcast %c7_i32 : i32 to vector<32x1xi32>
    %46 = arith.cmpi ne, %42, %45 : vector<32x1xi32>
    %c0_27 = arith.constant 0 : index
    %c0_28 = arith.constant 0 : index
    %47 = vector.load %arg8[%c0_27, %c0_28] : memref<1x128xf32, #tpu.memory_space<vmem>>, vector<1x128xf32>
    %c8_29 = arith.constant 8 : index
    %c0_30 = arith.constant 0 : index
    %48 = vector.load %arg12[%c8_29, %c0_30] : memref<64x128xf32, #tpu.memory_space<vmem>>, vector<32x128xf32>
    %c0_31 = arith.constant 0 : index
    %c1 = arith.constant 1 : index
    %c0_32 = arith.constant 0 : index
    %49 = vector.load %arg7[%c0_31, %c1, %c0_32] : memref<3x3x128xf32, #tpu.memory_space<vmem>>, vector<1x1x128xf32>
    %50 = vector.shape_cast %49 : vector<1x1x128xf32> to vector<1x128xf32>
    %51 = vector.broadcast %50 : vector<1x128xf32> to vector<32x128xf32>
    %52 = arith.mulf %48, %51 : vector<32x128xf32>
    %c16_33 = arith.constant 16 : index
    %c0_34 = arith.constant 0 : index
    %53 = vector.load %arg12[%c16_33, %c0_34] : memref<64x128xf32, #tpu.memory_space<vmem>>, vector<32x128xf32>
    %c1_35 = arith.constant 1 : index
    %c1_36 = arith.constant 1 : index
    %c0_37 = arith.constant 0 : index
    %54 = vector.load %arg7[%c1_35, %c1_36, %c0_37] : memref<3x3x128xf32, #tpu.memory_space<vmem>>, vector<1x1x128xf32>
    %55 = vector.shape_cast %54 : vector<1x1x128xf32> to vector<1x128xf32>
    %56 = vector.broadcast %55 : vector<1x128xf32> to vector<32x128xf32>
    %57 = arith.mulf %53, %56 : vector<32x128xf32>
    %58 = arith.addf %52, %57 : vector<32x128xf32>
    %c24 = arith.constant 24 : index
    %c0_38 = arith.constant 0 : index
    %59 = vector.load %arg12[%c24, %c0_38] : memref<64x128xf32, #tpu.memory_space<vmem>>, vector<32x128xf32>
    %c2 = arith.constant 2 : index
    %c1_39 = arith.constant 1 : index
    %c0_40 = arith.constant 0 : index
    %60 = vector.load %arg7[%c2, %c1_39, %c0_40] : memref<3x3x128xf32, #tpu.memory_space<vmem>>, vector<1x1x128xf32>
    %61 = vector.shape_cast %60 : vector<1x1x128xf32> to vector<1x128xf32>
    %62 = vector.broadcast %61 : vector<1x128xf32> to vector<32x128xf32>
    %63 = arith.mulf %59, %62 : vector<32x128xf32>
    %64 = arith.addf %58, %63 : vector<32x128xf32>
    %65 = vector.broadcast %47 : vector<1x128xf32> to vector<32x128xf32>
    %66 = arith.addf %65, %64 : vector<32x128xf32>
    %c9 = arith.constant 9 : index
    %c0_41 = arith.constant 0 : index
    %67 = vector.load %arg12[%c9, %c0_41] : memref<64x128xf32, #tpu.memory_space<vmem>>, vector<32x128xf32>
    %c0_42 = arith.constant 0 : index
    %c2_43 = arith.constant 2 : index
    %c0_44 = arith.constant 0 : index
    %68 = vector.load %arg7[%c0_42, %c2_43, %c0_44] : memref<3x3x128xf32, #tpu.memory_space<vmem>>, vector<1x1x128xf32>
    %69 = vector.shape_cast %68 : vector<1x1x128xf32> to vector<1x128xf32>
    %70 = vector.broadcast %69 : vector<1x128xf32> to vector<32x128xf32>
    %71 = arith.mulf %67, %70 : vector<32x128xf32>
    %c17 = arith.constant 17 : index
    %c0_45 = arith.constant 0 : index
    %72 = vector.load %arg12[%c17, %c0_45] : memref<64x128xf32, #tpu.memory_space<vmem>>, vector<32x128xf32>
    %c1_46 = arith.constant 1 : index
    %c2_47 = arith.constant 2 : index
    %c0_48 = arith.constant 0 : index
    %73 = vector.load %arg7[%c1_46, %c2_47, %c0_48] : memref<3x3x128xf32, #tpu.memory_space<vmem>>, vector<1x1x128xf32>
    %74 = vector.shape_cast %73 : vector<1x1x128xf32> to vector<1x128xf32>
    %75 = vector.broadcast %74 : vector<1x128xf32> to vector<32x128xf32>
    %76 = arith.mulf %72, %75 : vector<32x128xf32>
    %77 = arith.addf %71, %76 : vector<32x128xf32>
    %c25 = arith.constant 25 : index
    %c0_49 = arith.constant 0 : index
    %78 = vector.load %arg12[%c25, %c0_49] : memref<64x128xf32, #tpu.memory_space<vmem>>, vector<32x128xf32>
    %c2_50 = arith.constant 2 : index
    %c2_51 = arith.constant 2 : index
    %c0_52 = arith.constant 0 : index
    %79 = vector.load %arg7[%c2_50, %c2_51, %c0_52] : memref<3x3x128xf32, #tpu.memory_space<vmem>>, vector<1x1x128xf32>
    %80 = vector.shape_cast %79 : vector<1x1x128xf32> to vector<1x128xf32>
    %81 = vector.broadcast %80 : vector<1x128xf32> to vector<32x128xf32>
    %82 = arith.mulf %78, %81 : vector<32x128xf32>
    %83 = arith.addf %77, %82 : vector<32x128xf32>
    %c7 = arith.constant 7 : index
    %c0_53 = arith.constant 0 : index
    %84 = vector.load %arg12[%c7, %c0_53] : memref<64x128xf32, #tpu.memory_space<vmem>>, vector<32x128xf32>
    %c0_54 = arith.constant 0 : index
    %c0_55 = arith.constant 0 : index
    %c0_56 = arith.constant 0 : index
    %85 = vector.load %arg7[%c0_54, %c0_55, %c0_56] : memref<3x3x128xf32, #tpu.memory_space<vmem>>, vector<1x1x128xf32>
    %86 = vector.shape_cast %85 : vector<1x1x128xf32> to vector<1x128xf32>
    %87 = vector.broadcast %86 : vector<1x128xf32> to vector<32x128xf32>
    %88 = arith.mulf %84, %87 : vector<32x128xf32>
    %c15 = arith.constant 15 : index
    %c0_57 = arith.constant 0 : index
    %89 = vector.load %arg12[%c15, %c0_57] : memref<64x128xf32, #tpu.memory_space<vmem>>, vector<32x128xf32>
    %c1_58 = arith.constant 1 : index
    %c0_59 = arith.constant 0 : index
    %c0_60 = arith.constant 0 : index
    %90 = vector.load %arg7[%c1_58, %c0_59, %c0_60] : memref<3x3x128xf32, #tpu.memory_space<vmem>>, vector<1x1x128xf32>
    %91 = vector.shape_cast %90 : vector<1x1x128xf32> to vector<1x128xf32>
    %92 = vector.broadcast %91 : vector<1x128xf32> to vector<32x128xf32>
    %93 = arith.mulf %89, %92 : vector<32x128xf32>
    %94 = arith.addf %88, %93 : vector<32x128xf32>
    %c23 = arith.constant 23 : index
    %c0_61 = arith.constant 0 : index
    %95 = vector.load %arg12[%c23, %c0_61] : memref<64x128xf32, #tpu.memory_space<vmem>>, vector<32x128xf32>
    %c2_62 = arith.constant 2 : index
    %c0_63 = arith.constant 0 : index
    %c0_64 = arith.constant 0 : index
    %96 = vector.load %arg7[%c2_62, %c0_63, %c0_64] : memref<3x3x128xf32, #tpu.memory_space<vmem>>, vector<1x1x128xf32>
    %97 = vector.shape_cast %96 : vector<1x1x128xf32> to vector<1x128xf32>
    %98 = vector.broadcast %97 : vector<1x128xf32> to vector<32x128xf32>
    %99 = arith.mulf %95, %98 : vector<32x128xf32>
    %100 = arith.addf %94, %99 : vector<32x128xf32>
    %cst_65 = arith.constant 0.000000e+00 : f32
    %101 = vector.shape_cast %46 : vector<32x1xi1> to vector<32x1xi1>
    %102 = vector.broadcast %101 : vector<32x1xi1> to vector<32x128xi1>
    %103 = vector.broadcast %cst_65 : f32 to vector<32x128xf32>
    %104 = arith.select %102, %83, %103 : vector<32x128xi1>, vector<32x128xf32>
    %105 = arith.addf %66, %104 : vector<32x128xf32>
    %cst_66 = arith.constant 0.000000e+00 : f32
    %106 = vector.shape_cast %44 : vector<32x1xi1> to vector<32x1xi1>
    %107 = vector.broadcast %106 : vector<32x1xi1> to vector<32x128xi1>
    %108 = vector.broadcast %cst_66 : f32 to vector<32x128xf32>
    %109 = arith.select %107, %100, %108 : vector<32x128xi1>, vector<32x128xf32>
    %110 = arith.addf %105, %109 : vector<32x128xf32>
    %cst_67 = arith.constant 5.000000e-01 : f32
    %111 = vector.broadcast %cst_67 : f32 to vector<32x128xf32>
    %112 = arith.mulf %111, %110 : vector<32x128xf32>
    %cst_68 = arith.constant 0.707106769 : f32
    %113 = vector.broadcast %cst_68 : f32 to vector<32x128xf32>
    %114 = arith.mulf %110, %113 : vector<32x128xf32>
    %115 = math.erf %114 : vector<32x128xf32>
    %cst_69 = arith.constant 1.000000e+00 : f32
    %116 = vector.broadcast %cst_69 : f32 to vector<32x128xf32>
    %117 = arith.addf %116, %115 : vector<32x128xf32>
    %118 = arith.mulf %112, %117 : vector<32x128xf32>
    %119 = arith.truncf %118 : vector<32x128xf32> to vector<32x128xbf16>
    %c0_70 = arith.constant 0 : index
    %c0_71 = arith.constant 0 : index
    %120 = vector.load %arg9[%c0_70, %c0_71] : memref<128x128xbf16, #tpu.memory_space<vmem>>, vector<128x128xbf16>
    %cst_72 = arith.constant dense<0.000000e+00> : vector<32x128xf32>
    %121 = tpu.matmul %119, %120, %cst_72 {dimension_numbers = #tpu.dot_dimension_numbers<[1], [0], [0], [1], [0, 0, 1, 1], [], []>} : vector<32x128xbf16>, vector<128x128xbf16>, vector<32x128xf32> -> vector<32x128xf32>
    %c0_73 = arith.constant 0 : index
    %c0_74 = arith.constant 0 : index
    %122 = vector.load %arg10[%c0_73, %c0_74] : memref<1x128xf32, #tpu.memory_space<vmem>>, vector<1x128xf32>
    %123 = vector.broadcast %122 : vector<1x128xf32> to vector<32x128xf32>
    %124 = arith.addf %121, %123 : vector<32x128xf32>
    %c0_75 = arith.constant 0 : index
    %c0_76 = arith.constant 0 : index
    %c0_77 = arith.constant 0 : index
    %125 = vector.load %arg11[%c0_75, %c0_76, %c0_77] : memref<1x32x128xf32, #tpu.memory_space<vmem>>, vector<1x32x128xf32>
    %126 = vector.shape_cast %125 : vector<1x32x128xf32> to vector<32x128xf32>
    %127 = vector.shape_cast %124 : vector<32x128xf32> to vector<1x32x128xf32>
    tpu.vector_store %arg11[%c0_75, %c0_76, %c0_77], %127 {strides = array<i32>} : memref<1x32x128xf32, #tpu.memory_space<vmem>>, vector<1x32x128xf32>,
    return
  }
  func.func @transform_0(%arg0: i32, %arg1: i32) -> (i32, i32, i32) {
    %c0_i32 = arith.constant 0 : i32
    %c0_i32_0 = arith.constant 0 : i32
    return %arg0, %arg1, %c0_i32 : i32, i32, i32
  }
  func.func @transform_1(%arg0: i32, %arg1: i32) -> (i32, i32, i32, i32) {
    %c4_i32 = arith.constant 4 : i32
    %0 = arith.muli %arg1, %c4_i32 : i32
    %c1_i32 = arith.constant 1 : i32
    %1 = arith.subi %0, %c1_i32 : i32
    %c0_i32 = arith.constant 0 : i32
    %2 = arith.maxsi %1, %c0_i32 : i32
    %c0_i32_0 = arith.constant 0 : i32
    %c0_i32_1 = arith.constant 0 : i32
    %c0_i32_2 = arith.constant 0 : i32
    return %arg0, %2, %c0_i32_0, %c0_i32_1 : i32, i32, i32, i32
  }
  func.func @transform_2(%arg0: i32, %arg1: i32) -> (i32, i32, i32, i32) {
    %c1_i32 = arith.constant 1 : i32
    %0 = arith.addi %arg1, %c1_i32 : i32
    %c4_i32 = arith.constant 4 : i32
    %1 = arith.muli %0, %c4_i32 : i32
    %c7_i32 = arith.constant 7 : i32
    %2 = arith.minsi %1, %c7_i32 : i32
    %c0_i32 = arith.constant 0 : i32
    %c0_i32_0 = arith.constant 0 : i32
    %c0_i32_1 = arith.constant 0 : i32
    return %arg0, %2, %c0_i32, %c0_i32_0 : i32, i32, i32, i32
  }
  func.func @transform_3(%arg0: i32, %arg1: i32) -> (i32, i32) {
    %c0_i32 = arith.constant 0 : i32
    %c0_i32_0 = arith.constant 0 : i32
    %c0_i32_1 = arith.constant 0 : i32
    return %c0_i32, %c0_i32_0 : i32, i32
  }
  func.func @transform_4(%arg0: i32, %arg1: i32) -> (i32, i32) {
    %c0_i32 = arith.constant 0 : i32
    %c0_i32_0 = arith.constant 0 : i32
    %c0_i32_1 = arith.constant 0 : i32
    return %c0_i32, %c0_i32_0 : i32, i32
  }
  func.func @transform_5(%arg0: i32, %arg1: i32) -> (i32, i32, i32) {
    %c0_i32 = arith.constant 0 : i32
    %c0_i32_0 = arith.constant 0 : i32
    %c0_i32_1 = arith.constant 0 : i32
    %c0_i32_2 = arith.constant 0 : i32
    return %c0_i32, %c0_i32_0, %c0_i32_1 : i32, i32, i32
  }
  func.func @transform_6(%arg0: i32, %arg1: i32) -> (i32, i32) {
    %c0_i32 = arith.constant 0 : i32
    %c0_i32_0 = arith.constant 0 : i32
    %c0_i32_1 = arith.constant 0 : i32
    return %c0_i32, %c0_i32_0 : i32, i32
  }
  func.func @transform_7(%arg0: i32, %arg1: i32) -> (i32, i32) {
    %c0_i32 = arith.constant 0 : i32
    %c0_i32_0 = arith.constant 0 : i32
    %c0_i32_1 = arith.constant 0 : i32
    return %c0_i32, %c0_i32_0 : i32, i32
  }
  func.func @transform_8(%arg0: i32, %arg1: i32) -> (i32, i32) {
    %c0_i32 = arith.constant 0 : i32
    %c0_i32_0 = arith.constant 0 : i32
    %c0_i32_1 = arith.constant 0 : i32
    return %c0_i32, %c0_i32_0 : i32, i32
  }
  func.func @transform_9(%arg0: i32, %arg1: i32) -> (i32, i32, i32) {
    %c0_i32 = arith.constant 0 : i32
    %c0_i32_0 = arith.constant 0 : i32
    return %arg0, %arg1, %c0_i32 : i32, i32, i32
  }
}

</mosaic_0001>

<llo_original>
// kernel: tpu_custom_call.1
$region0: #{tpu_custom_call.1}
  #allocation0 [shape = 'u32[]', space=smem, size = 0x4, offset = 0x4, fixed_abs, tag = 'smem constant byte address 0x4 - core index']
  #allocation1 [shape = 'u32[144,128]{1,0:T(1,128)}', space=vmem, size = 0x12000, scoped, tag = 'internal scratch']
  #allocation2 [shape = 'f32[64,128]{1,0:T(8,128)}', space=vmem, size = 0x8000, scoped, tag = 'scratch operand']
  %s0 = inlined_call_operand.hbm [shape: bf16[2,64,128], index: 0, kind: input, shape index: {}]
  %s1 = inlined_call_operand.hbm [shape: bf16[2,8,8,128], index: 1, kind: input, shape index: {}]
  %s2 = inlined_call_operand.hbm [shape: bf16[2,8,8,128], index: 2, kind: input, shape index: {}]
  %s3 = inlined_call_operand.hbm [shape: bf16[128,128], index: 3, kind: input, shape index: {}]
  %s4 = inlined_call_operand.vmem [shape: f32[1,128], index: 4, kind: input, shape index: {}]
  %s5 = inlined_call_operand.vmem [shape: f32[3,3,128], index: 5, kind: input, shape index: {}]
  %s6 = inlined_call_operand.vmem [shape: f32[1,128], index: 6, kind: input, shape index: {}]
  %s7 = inlined_call_operand.hbm [shape: bf16[128,128], index: 7, kind: input, shape index: {}]
  %s8 = inlined_call_operand.vmem [shape: f32[1,128], index: 8, kind: input, shape index: {}]
  %s9 = inlined_call_operand.hbm [shape: f32[2,64,128], index: 9, kind: output, shape index: {}]
  %s10 = sld [smem:[#allocation0]]
  $region97: #{tpu_custom_call.1} parent=0
    _
  %s12 = ssub.s32 1, %s10
  %s13 = scalar_select 0, %s12, %s10
  $region1: #{tpu_custom_call.1} parent=0
    #allocation3 [shape = 'u8[16384]{0}', space=vmem, size = 0x4000, scoped, tag = 'input window, operand 0']
    #allocation4 [shape = 's32[2]{0}', space=sflag, size = 0x8, scoped, tag = 'scoped memory for tpu_custom_call.1']
    #allocation5 [shape = 's32[2]{0}', space=sflag, size = 0x8, scoped, tag = 'scoped memory for tpu_custom_call.1']
    #allocation6 [shape = 'u8[4096]{0}', space=vmem, size = 0x1000, scoped, tag = 'input window, operand 1']
    #allocation7 [shape = 's32[2]{0}', space=sflag, size = 0x8, scoped, tag = 'scoped memory for tpu_custom_call.1']
    #allocation8 [shape = 'u8[4096]{0}', space=vmem, size = 0x1000, scoped, tag = 'input window, operand 2']
    #allocation9 [shape = 'u8[32768]{0}', space=vmem, size = 0x8000, scoped, tag = 'input window, operand 3, single buffered']
    #allocation10 [shape = 's32[1]{0}', space=sflag, size = 0x4, scoped, tag = 'scoped memory for tpu_custom_call.1']
    #allocation11 [shape = 'u8[32768]{0}', space=vmem, size = 0x8000, scoped, tag = 'input window, operand 7, single buffered']
    #allocation12 [shape = 'u8[32768]{0}', space=vmem, size = 0x8000, scoped, tag = 'output window, operand 0']
    %14 = vsyncpa [#allocation4], 0
    %s15 = scalar_lea.sflag [#allocation4], 1
    %16 = vsyncpa %s15, 0
    %17 = vsyncpa [#allocation7], 0
    %s18 = scalar_lea.sflag [#allocation7], 1
    %19 = vsyncpa %s18, 0
    %20 = vsyncpa [#allocation10], 0
    %21 = vsyncpa [#allocation5], 0
    %s22 = scalar_lea.sflag [#allocation5], 1
    %23 = vsyncpa %s22, 0
    loop: start=0, step=1, limit=6
    $region2: #{tpu_custom_call.1} parent=1 // loop_pre_header
      _
    $region3: #{tpu_custom_call.1} parent=1 // loop_header
      %s25 = sphi 0, %s29
      %p26 = scmp.ge.s32.totalorder %s25, 6
      %s32 = sphi 0, %s44
      %s33 = sphi 0, %s40
      %s34 = sphi 0, %s32
      %s35 = sphi 0, %s33
      %s36 = sphi 0, %s34
      %s37 = sphi 0, %s35
      %s49 = sphi 0, %s51
      %s52 = sphi 0, %s49
      %s53 = sphi 0, %s52
      %s69 = sphi 0, %s53
      %s85 = sphi 0, %s87
      %s88 = sphi 0, %s85
      %s89 = sphi 0, %s88
      %s105 = sphi 0, %s89
      %s121 = sphi 0, %s123
      %s124 = sphi 0, %s121
      %s125 = sphi 0, %s124
      %s141 = sphi 0, %s125
      %s145 = sphi 0, %s145
      %s147 = sphi 0, %s145
      %s148 = sphi 0, %s147
      %s162 = sphi 0, %s148
      %s166 = sphi 0, %s166
      %s168 = sphi 0, %s166
      %s169 = sphi 0, %s168
      %s183 = sphi 0, %s169
      %s187 = sphi 0, %s187
      %s189 = sphi 0, %s187
      %s190 = sphi 0, %s189
      %s204 = sphi 0, %s190
      %s208 = sphi 0, %s208
      %s210 = sphi 0, %s208
      %s211 = sphi 0, %s210
      %s225 = sphi 0, %s211
      %s229 = sphi 0, %s229
      %s231 = sphi 0, %s229
      %s232 = sphi 0, %s231
      %s246 = sphi 0, %s232
      %s250 = sphi 0, %s250
      %s252 = sphi 0, %s250
      %s253 = sphi 0, %s252
      %s267 = sphi 0, %s253
      %s275 = sphi 0, %s277
      %s278 = sphi 0, %s275
      %s279 = sphi 0, %s278
      %s295 = sphi 0, %s279
    $region4: #{tpu_custom_call.1} parent=1 // loop_header_branch
      %28 = sbr.rel (%p26) target = $region8
    $region5: #{tpu_custom_call.1} parent=1 // loop_body
      %s30 = ssub.s32 %s25, 1
      %s31 = ssub.s32 %s25, 2
      %s38 = sadd.s32 1, %s33
      %p39 = scmp.ge.s32.totalorder %s38, 2
      %s40 = scalar_select %p39, 0, %s38
      %s41 = sadd.s32 1, %s32
      %s42 = scalar_select %p39, %s41, %s32
      %p43 = scmp.ge.s32.totalorder %s42, 2
      %s44 = scalar_select %p43, 0, %s42
      %s45 = ssub.s32 %s32, %s44
      %s46 = ssub.s32 %s33, %s40
      %s47 = sor.u32 %s45, %s46
      %p48 = scmp.eq.s32.totalorder %s47, 0
      %s50 = sadd.s32 %s49, 1
      %s51 = scalar_select %p48, %s49, %s50
      %p54 = pneg %p48
      %p55 = scmp.eq.s32.totalorder %s25, 3
      %p56 = por %p54, %p55
      %p57 = scmp.ne.s32.totalorder %s49, %s52
      %p58 = scmp.eq.s32.totalorder %s25, 0
      %p59 = por %p57, %p58
      %p60 = scmp.ne.s32.totalorder %s49, %s52
      %p61 = scmp.eq.s32.totalorder %s30, 3
      %p62 = por %p60, %p61
      %p63 = scmp.ne.s32.totalorder %s52, %s53
      %p64 = scmp.eq.s32.totalorder %s30, 0
      %p65 = por %p63, %p64
      %p66 = scmp.ne.s32.totalorder %s52, %s53
      %p67 = scmp.eq.s32.totalorder %s31, 3
      %p68 = por %p66, %p67
      %p70 = scmp.ne.s32.totalorder %s53, %s69
      %p71 = scmp.eq.s32.totalorder %s31, 0
      %p72 = por %p70, %p71
      %s73 = smul.u32 %s33, 4
      %s74 = ssub.s32 %s73, 1
      %p75 = scmp.gt.s32.totalorder %s74, 0
      %s76 = scalar_select %p75, %s74, 0
      %s77 = smul.u32 %s40, 4
      %s78 = ssub.s32 %s77, 1
      %p79 = scmp.gt.s32.totalorder %s78, 0
      %s80 = scalar_select %p79, %s78, 0
      %s81 = ssub.s32 %s32, %s44
      %s82 = ssub.s32 %s76, %s80
      %s83 = sor.u32 %s81, %s82
      %p84 = scmp.eq.s32.totalorder %s83, 0
      %s86 = sadd.s32 %s85, 1
      %s87 = scalar_select %p84, %s85, %s86
      %p90 = pneg %p84
      %p91 = scmp.eq.s32.totalorder %s25, 3
      %p92 = por %p90, %p91
      %p93 = scmp.ne.s32.totalorder %s85, %s88
      %p94 = scmp.eq.s32.totalorder %s25, 0
      %p95 = por %p93, %p94
      %p96 = scmp.ne.s32.totalorder %s85, %s88
      %p97 = scmp.eq.s32.totalorder %s30, 3
      %p98 = por %p96, %p97
      %p99 = scmp.ne.s32.totalorder %s88, %s89
      %p100 = scmp.eq.s32.totalorder %s30, 0
      %p101 = por %p99, %p100
      %p102 = scmp.ne.s32.totalorder %s88, %s89
      %p103 = scmp.eq.s32.totalorder %s31, 3
      %p104 = por %p102, %p103
      %p106 = scmp.ne.s32.totalorder %s89, %s105
      %p107 = scmp.eq.s32.totalorder %s31, 0
      %p108 = por %p106, %p107
      %s109 = sadd.s32 %s33, 1
      %s110 = smul.u32 %s109, 4
      %p111 = scmp.lt.s32.totalorder %s110, 7
      %s112 = scalar_select %p111, %s110, 7
      %s113 = sadd.s32 %s40, 1
      %s114 = smul.u32 %s113, 4
      %p115 = scmp.lt.s32.totalorder %s114, 7
      %s116 = scalar_select %p115, %s114, 7
      %s117 = ssub.s32 %s32, %s44
      %s118 = ssub.s32 %s112, %s116
      %s119 = sor.u32 %s117, %s118
      %p120 = scmp.eq.s32.totalorder %s119, 0
      %s122 = sadd.s32 %s121, 1
      %s123 = scalar_select %p120, %s121, %s122
      %p126 = pneg %p120
      %p127 = scmp.eq.s32.totalorder %s25, 3
      %p128 = por %p126, %p127
      %p129 = scmp.ne.s32.totalorder %s121, %s124
      %p130 = scmp.eq.s32.totalorder %s25, 0
      %p131 = por %p129, %p130
      %p132 = scmp.ne.s32.totalorder %s121, %s124
      %p133 = scmp.eq.s32.totalorder %s30, 3
      %p134 = por %p132, %p133
      %p135 = scmp.ne.s32.totalorder %s124, %s125
      %p136 = scmp.eq.s32.totalorder %s30, 0
      %p137 = por %p135, %p136
      %p138 = scmp.ne.s32.totalorder %s124, %s125
      %p139 = scmp.eq.s32.totalorder %s31, 3
      %p140 = por %p138, %p139
      %p142 = scmp.ne.s32.totalorder %s125, %s141
      %p143 = scmp.eq.s32.totalorder %s31, 0
      %p144 = por %p142, %p143
      %s146 = sadd.s32 %s145, 1
      %p149 = scmp.eq.s32.totalorder %s25, 3
      %p150 = scmp.ne.s32.totalorder %s145, %s147
      %p151 = scmp.eq.s32.totalorder %s25, 0
      %p152 = por %p150, %p151
      %p153 = scmp.ne.s32.totalorder %s145, %s147
      %p154 = scmp.eq.s32.totalorder %s30, 3
      %p155 = por %p153, %p154
      %p156 = scmp.ne.s32.totalorder %s147, %s148
      %p157 = scmp.eq.s32.totalorder %s30, 0
      %p158 = por %p156, %p157
      %p159 = scmp.ne.s32.totalorder %s147, %s148
      %p160 = scmp.eq.s32.totalorder %s31, 3
      %p161 = por %p159, %p160
      %p163 = scmp.ne.s32.totalorder %s148, %s162
      %p164 = scmp.eq.s32.totalorder %s31, 0
      %p165 = por %p163, %p164
      %s167 = sadd.s32 %s166, 1
      %p170 = scmp.eq.s32.totalorder %s25, 3
      %p171 = scmp.ne.s32.totalorder %s166, %s168
      %p172 = scmp.eq.s32.totalorder %s25, 0
      %p173 = por %p171, %p172
      %p174 = scmp.ne.s32.totalorder %s166, %s168
      %p175 = scmp.eq.s32.totalorder %s30, 3
      %p176 = por %p174, %p175
      %p177 = scmp.ne.s32.totalorder %s168, %s169
      %p178 = scmp.eq.s32.totalorder %s30, 0
      %p179 = por %p177, %p178
      %p180 = scmp.ne.s32.totalorder %s168, %s169
      %p181 = scmp.eq.s32.totalorder %s31, 3
      %p182 = por %p180, %p181
      %p184 = scmp.ne.s32.totalorder %s169, %s183
      %p185 = scmp.eq.s32.totalorder %s31, 0
      %p186 = por %p184, %p185
      %s188 = sadd.s32 %s187, 1
      %p191 = scmp.eq.s32.totalorder %s25, 3
      %p192 = scmp.ne.s32.totalorder %s187, %s189
      %p193 = scmp.eq.s32.totalorder %s25, 0
      %p194 = por %p192, %p193
      %p195 = scmp.ne.s32.totalorder %s187, %s189
      %p196 = scmp.eq.s32.totalorder %s30, 3
      %p197 = por %p195, %p196
      %p198 = scmp.ne.s32.totalorder %s189, %s190
      %p199 = scmp.eq.s32.totalorder %s30, 0
      %p200 = por %p198, %p199
      %p201 = scmp.ne.s32.totalorder %s189, %s190
      %p202 = scmp.eq.s32.totalorder %s31, 3
      %p203 = por %p201, %p202
      %p205 = scmp.ne.s32.totalorder %s190, %s204
      %p206 = scmp.eq.s32.totalorder %s31, 0
      %p207 = por %p205, %p206
      %s209 = sadd.s32 %s208, 1
      %p212 = scmp.eq.s32.totalorder %s25, 3
      %p213 = scmp.ne.s32.totalorder %s208, %s210
      %p214 = scmp.eq.s32.totalorder %s25, 0
      %p215 = por %p213, %p214
      %p216 = scmp.ne.s32.totalorder %s208, %s210
      %p217 = scmp.eq.s32.totalorder %s30, 3
      %p218 = por %p216, %p217
      %p219 = scmp.ne.s32.totalorder %s210, %s211
      %p220 = scmp.eq.s32.totalorder %s30, 0
      %p221 = por %p219, %p220
      %p222 = scmp.ne.s32.totalorder %s210, %s211
      %p223 = scmp.eq.s32.totalorder %s31, 3
      %p224 = por %p222, %p223
      %p226 = scmp.ne.s32.totalorder %s211, %s225
      %p227 = scmp.eq.s32.totalorder %s31, 0
      %p228 = por %p226, %p227
      %s230 = sadd.s32 %s229, 1
      %p233 = scmp.eq.s32.totalorder %s25, 3
      %p234 = scmp.ne.s32.totalorder %s229, %s231
      %p235 = scmp.eq.s32.totalorder %s25, 0
      %p236 = por %p234, %p235
      %p237 = scmp.ne.s32.totalorder %s229, %s231
      %p238 = scmp.eq.s32.totalorder %s30, 3
      %p239 = por %p237, %p238
      %p240 = scmp.ne.s32.totalorder %s231, %s232
      %p241 = scmp.eq.s32.totalorder %s30, 0
      %p242 = por %p240, %p241
      %p243 = scmp.ne.s32.totalorder %s231, %s232
      %p244 = scmp.eq.s32.totalorder %s31, 3
      %p245 = por %p243, %p244
      %p247 = scmp.ne.s32.totalorder %s232, %s246
      %p248 = scmp.eq.s32.totalorder %s31, 0
      %p249 = por %p247, %p248
      %s251 = sadd.s32 %s250, 1
      %p254 = scmp.eq.s32.totalorder %s25, 3
      %p255 = scmp.ne.s32.totalorder %s250, %s252
      %p256 = scmp.eq.s32.totalorder %s25, 0
      %p257 = por %p255, %p256
      %p258 = scmp.ne.s32.totalorder %s250, %s252
      %p259 = scmp.eq.s32.totalorder %s30, 3
      %p260 = por %p258, %p259
      %p261 = scmp.ne.s32.totalorder %s252, %s253
      %p262 = scmp.eq.s32.totalorder %s30, 0
      %p263 = por %p261, %p262
      %p264 = scmp.ne.s32.totalorder %s252, %s253
      %p265 = scmp.eq.s32.totalorder %s31, 3
      %p266 = por %p264, %p265
      %p268 = scmp.ne.s32.totalorder %s253, %s267
      %p269 = scmp.eq.s32.totalorder %s31, 0
      %p270 = por %p268, %p269
      %s271 = ssub.s32 %s32, %s44
      %s272 = ssub.s32 %s33, %s40
      %s273 = sor.u32 %s271, %s272
      %p274 = scmp.eq.s32.totalorder %s273, 0
      %s276 = sadd.s32 %s275, 1
      %s277 = scalar_select %p274, %s275, %s276
      %p280 = pneg %p274
      %p281 = scmp.eq.s32.totalorder %s25, 3
      %p282 = por %p280, %p281
      %p283 = scmp.ne.s32.totalorder %s275, %s278
      %p284 = scmp.eq.s32.totalorder %s25, 0
      %p285 = por %p283, %p284
      %p286 = scmp.ne.s32.totalorder %s275, %s278
      %p287 = scmp.eq.s32.totalorder %s30, 3
      %p288 = por %p286, %p287
      %p289 = scmp.ne.s32.totalorder %s278, %s279
      %p290 = scmp.eq.s32.totalorder %s30, 0
      %p291 = por %p289, %p290
      %p292 = scmp.ne.s32.totalorder %s278, %s279
      %p293 = scmp.eq.s32.totalorder %s31, 3
      %p294 = por %p292, %p293
      %p296 = scmp.ne.s32.totalorder %s279, %s295
      %p297 = scmp.eq.s32.totalorder %s31, 0
      %p298 = por %p296, %p297
      %p299 = scmp.le.s32.totalorder 1, %s25
      %p300 = scmp.lt.s32.totalorder %s25, 5
      %p301 = pnand %p299, %p300
      %p302 = pneg %p301
      // Predicated region
      $region9: #{tpu_custom_call.1} parent=5 // pred_check
        _
      $region10: #{tpu_custom_call.1} parent=5 // pred_check_branch
        %304 = sbr.rel (%p301) target = $region12
      $region11: #{tpu_custom_call.1} parent=5 // pred_region
        %s305 = ssub.s32 %s25, 1
        // Predicated region
        $region13: #{tpu_custom_call.1} parent=11 // pred_check
          %p306 = pneg %p158
        $region14: #{tpu_custom_call.1} parent=11 // pred_check_branch
          %308 = sbr.rel (%p306) target = $region16
        $region15: #{tpu_custom_call.1} parent=11 // pred_region
          %s310 = ssub.s32 1024, 1024
          %311 = vsyncadd [#allocation10], %s310
          %s312 = sshll.u32 [#allocation9], 4
          %s313 = int_to_ptr.vmem [resolvable:$true] %s312
          %318 = dma.hbm_to_vmem [thread:$0]  %s3, 1024, %s313, [#allocation10], 64, 64, 4
        $region16: #{tpu_custom_call.1} parent=11 // pred_fallthru
          _
        // Predicated region
        $region17: #{tpu_custom_call.1} parent=11 // pred_check
          %p319 = pneg %p179
        $region18: #{tpu_custom_call.1} parent=11 // pred_check_branch
          %321 = sbr.rel (%p319) target = $region20
        $region19: #{tpu_custom_call.1} parent=11 // pred_region
          _
        $region20: #{tpu_custom_call.1} parent=11 // pred_fallthru
          _
        // Predicated region
        $region21: #{tpu_custom_call.1} parent=11 // pred_check
          %p322 = pneg %p200
        $region22: #{tpu_custom_call.1} parent=11 // pred_check_branch
          %324 = sbr.rel (%p322) target = $region24
        $region23: #{tpu_custom_call.1} parent=11 // pred_region
          _
        $region24: #{tpu_custom_call.1} parent=11 // pred_fallthru
          _
        // Predicated region
        $region25: #{tpu_custom_call.1} parent=11 // pred_check
          %p325 = pneg %p221
        $region26: #{tpu_custom_call.1} parent=11 // pred_check_branch
          %327 = sbr.rel (%p325) target = $region28
        $region27: #{tpu_custom_call.1} parent=11 // pred_region
          _
        $region28: #{tpu_custom_call.1} parent=11 // pred_fallthru
          _
        // Predicated region
        $region29: #{tpu_custom_call.1} parent=11 // pred_check
          %p328 = pneg %p242
        $region30: #{tpu_custom_call.1} parent=11 // pred_check_branch
          %330 = sbr.rel (%p328) target = $region32
        $region31: #{tpu_custom_call.1} parent=11 // pred_region
          %s332 = ssub.s32 1024, 1024
          %333 = vsyncadd [#allocation10], %s332
          %s334 = sshll.u32 [#allocation11], 4
          %s335 = int_to_ptr.vmem [resolvable:$true] %s334
          %340 = dma.hbm_to_vmem [thread:$0]  %s7, 1024, %s335, [#allocation10], 64, 64, 4
        $region32: #{tpu_custom_call.1} parent=11 // pred_fallthru
          _
        // Predicated region
        $region33: #{tpu_custom_call.1} parent=11 // pred_check
          %p341 = pneg %p263
        $region34: #{tpu_custom_call.1} parent=11 // pred_check_branch
          %343 = sbr.rel (%p341) target = $region36
        $region35: #{tpu_custom_call.1} parent=11 // pred_region
          _
        $region36: #{tpu_custom_call.1} parent=11 // pred_fallthru
          _
      $region12: #{tpu_custom_call.1} parent=5 // pred_fallthru
        _
      %p344 = scmp.lt.s32.totalorder %s25, 4
      // Predicated region
      $region37: #{tpu_custom_call.1} parent=5 // pred_check
        %p345 = pneg %p344
      $region38: #{tpu_custom_call.1} parent=5 // pred_check_branch
        %347 = sbr.rel (%p345) target = $region40
      $region39: #{tpu_custom_call.1} parent=5 // pred_region
        // Predicated region
        $region41: #{tpu_custom_call.1} parent=39 // pred_check
          %p348 = pneg %p59
        $region42: #{tpu_custom_call.1} parent=39 // pred_check_branch
          %350 = sbr.rel (%p348) target = $region44
        $region43: #{tpu_custom_call.1} parent=39 // pred_region
          %s351 = sand.u32 %s49, 1
          %s352 = scalar_lea.sflag [#allocation4], %s351
          %s353 = sand.u32 %s49, 1
          %s354 = smul.addr %s353, 16
          %s355 = scalar_lea.vmem [#allocation3], %s354
          %s356 = smul.u32 4, %s33
          %s358 = ssub.s32 256, 256
          %359 = vsyncadd %s352, %s358
          %s360 = smul.addr %s32, 8
          %s361 = sadd.s32 %s356, %s360
          %s362 = smul.addr %s361, 64
          %s363 = scalar_lea.hbm %s0, %s362
          %s364 = sshll.u32 %s355, 4
          %s365 = int_to_ptr.vmem [resolvable:$true] %s364
          %370 = dma.hbm_to_vmem [thread:$0]  %s363, 256, %s365, %s352, 64, 64, 4
        $region44: #{tpu_custom_call.1} parent=39 // pred_fallthru
          _
        // Predicated region
        $region45: #{tpu_custom_call.1} parent=39 // pred_check
          %p371 = pneg %p95
        $region46: #{tpu_custom_call.1} parent=39 // pred_check_branch
          %373 = sbr.rel (%p371) target = $region48
        $region47: #{tpu_custom_call.1} parent=39 // pred_region
          %s374 = sand.u32 %s25, 1
          %s375 = scalar_lea.sflag [#allocation7], %s374
          %s376 = sand.u32 %s85, 1
          %s377 = smul.addr %s376, 4
          %s378 = scalar_lea.vmem [#allocation6], %s377
          %s379 = smul.u32 %s33, 4
          %s380 = ssub.s32 %s379, 1
          %p381 = scmp.gt.s32.totalorder %s380, 0
          %s382 = scalar_select %p381, %s380, 0
          %s384 = ssub.s32 64, 64
          %385 = vsyncadd %s375, %s384
          %s386 = smul.addr %s32, 8
          %s387 = sadd.s32 %s382, %s386
          %s388 = smul.addr %s387, 64
          %s389 = scalar_lea.hbm %s1, %s388
          %s391 = sshll.u32 %s378, 4
          %s392 = int_to_ptr.vmem [resolvable:$true] %s391
          %394 = dma.hbm_to_vmem [thread:$0]  %s389, 64, %s392, %s375
        $region48: #{tpu_custom_call.1} parent=39 // pred_fallthru
          _
        // Predicated region
        $region49: #{tpu_custom_call.1} parent=39 // pred_check
          %p395 = pneg %p131
        $region50: #{tpu_custom_call.1} parent=39 // pred_check_branch
          %397 = sbr.rel (%p395) target = $region52
        $region51: #{tpu_custom_call.1} parent=39 // pred_region
          %s398 = sand.u32 %s25, 1
          %s399 = scalar_lea.sflag [#allocation7], %s398
          %s400 = sand.u32 %s121, 1
          %s401 = smul.addr %s400, 4
          %s402 = scalar_lea.vmem [#allocation8], %s401
          %s403 = sadd.s32 %s33, 1
          %s404 = smul.u32 %s403, 4
          %p405 = scmp.lt.s32.totalorder %s404, 7
          %s406 = scalar_select %p405, %s404, 7
          %s408 = ssub.s32 64, 64
          %409 = vsyncadd %s399, %s408
          %s410 = smul.addr %s32, 8
          %s411 = sadd.s32 %s406, %s410
          %s412 = smul.addr %s411, 64
          %s413 = scalar_lea.hbm %s2, %s412
          %s415 = sshll.u32 %s402, 4
          %s416 = int_to_ptr.vmem [resolvable:$true] %s415
          %418 = dma.hbm_to_vmem [thread:$0]  %s413, 64, %s416, %s399
        $region52: #{tpu_custom_call.1} parent=39 // pred_fallthru
          _
      $region40: #{tpu_custom_call.1} parent=5 // pred_fallthru
        _
      %p419 = scmp.le.s32.totalorder 1, %s25
      %p420 = scmp.lt.s32.totalorder %s25, 5
      %p421 = pnand %p419, %p420
      %p422 = pneg %p421
      // Predicated region
      $region53: #{tpu_custom_call.1} parent=5 // pred_check
        _
      $region54: #{tpu_custom_call.1} parent=5 // pred_check_branch
        %424 = sbr.rel (%p421) target = $region56
      $region55: #{tpu_custom_call.1} parent=5 // pred_region
        %s425 = ssub.s32 %s25, 1
        %s426 = sand.u32 %s52, 1
        %s427 = scalar_lea.sflag [#allocation4], %s426
        %s428 = sand.u32 %s52, 1
        %s429 = smul.addr %s428, 16
        %s430 = scalar_lea.vmem [#allocation3], %s429
        // Predicated region
        $region57: #{tpu_custom_call.1} parent=55 // pred_check
          %p431 = pneg %p65
        $region58: #{tpu_custom_call.1} parent=55 // pred_check_branch
          %433 = sbr.rel (%p431) target = $region60
        $region59: #{tpu_custom_call.1} parent=55 // pred_region
          %434 = dma.done %s427, 256
        $region60: #{tpu_custom_call.1} parent=55 // pred_fallthru
          _
        %s435 = sand.u32 %s30, 1
        %s436 = scalar_lea.sflag [#allocation7], %s435
        %s437 = sand.u32 %s88, 1
        %s438 = smul.addr %s437, 4
        %s439 = scalar_lea.vmem [#allocation6], %s438
        // Predicated region
        $region61: #{tpu_custom_call.1} parent=55 // pred_check
          %p440 = pneg %p101
        $region62: #{tpu_custom_call.1} parent=55 // pred_check_branch
          %442 = sbr.rel (%p440) target = $region64
        $region63: #{tpu_custom_call.1} parent=55 // pred_region
          %443 = dma.done %s436, 64
        $region64: #{tpu_custom_call.1} parent=55 // pred_fallthru
          _
        %s444 = sand.u32 %s30, 1
        %s445 = scalar_lea.sflag [#allocation7], %s444
        %s446 = sand.u32 %s124, 1
        %s447 = smul.addr %s446, 4
        %s448 = scalar_lea.vmem [#allocation8], %s447
        // Predicated region
        $region65: #{tpu_custom_call.1} parent=55 // pred_check
          %p449 = pneg %p137
        $region66: #{tpu_custom_call.1} parent=55 // pred_check_branch
          %451 = sbr.rel (%p449) target = $region68
        $region67: #{tpu_custom_call.1} parent=55 // pred_region
          %452 = dma.done %s445, 64
        $region68: #{tpu_custom_call.1} parent=55 // pred_fallthru
          _
        // Predicated region
        $region69: #{tpu_custom_call.1} parent=55 // pred_check
          %p453 = pneg %p158
        $region70: #{tpu_custom_call.1} parent=55 // pred_check_branch
          %455 = sbr.rel (%p453) target = $region72
        $region71: #{tpu_custom_call.1} parent=55 // pred_region
          %456 = dma.done [#allocation10], 1024
        $region72: #{tpu_custom_call.1} parent=55 // pred_fallthru
          _
        // Predicated region
        $region73: #{tpu_custom_call.1} parent=55 // pred_check
          %p457 = pneg %p242
        $region74: #{tpu_custom_call.1} parent=55 // pred_check_branch
          %459 = sbr.rel (%p457) target = $region76
        $region75: #{tpu_custom_call.1} parent=55 // pred_region
          %460 = dma.done [#allocation10], 1024
        $region76: #{tpu_custom_call.1} parent=55 // pred_fallthru
          _
        %s461 = sand.u32 %s52, 1
        %s462 = scalar_lea.sflag [#allocation4], %s461
        %s463 = sand.u32 %s52, 1
        %s464 = smul.addr %s463, 16
        %s465 = scalar_lea.vmem [#allocation3], %s464
        %p466 = pneg %p65
        %p467 = pneg %p62
        %s468 = sand.u32 %s30, 1
        %s469 = scalar_lea.sflag [#allocation7], %s468
        %s470 = sand.u32 %s88, 1
        %s471 = smul.addr %s470, 4
        %s472 = scalar_lea.vmem [#allocation6], %s471
        %p473 = pneg %p101
        %p474 = pneg %p98
        %s475 = sand.u32 %s30, 1
        %s476 = scalar_lea.sflag [#allocation7], %s475
        %s477 = sand.u32 %s124, 1
        %s478 = smul.addr %s477, 4
        %s479 = scalar_lea.vmem [#allocation8], %s478
        %p480 = pneg %p137
        %p481 = pneg %p134
        %p482 = pneg %p158
        %p483 = pneg %p155
        %p484 = pneg %p179
        %p485 = pneg %p176
        %p486 = pneg %p200
        %p487 = pneg %p197
        %p488 = pneg %p221
        %p489 = pneg %p218
        %p490 = pneg %p242
        %p491 = pneg %p239
        %p492 = pneg %p263
        %p493 = pneg %p260
        %p494 = pneg %p291
        %p495 = pneg %p288
        %s496 = sand.u32 %s278, 1
        %s497 = scalar_lea.sflag [#allocation5], %s496
        %s498 = sand.u32 %s278, 1
        %s499 = smul.addr %s498, 32
        %s500 = scalar_lea.vmem [#allocation12], %s499
        %s501 = smul.u32 4, %s35
        %s502 = smul.u32 %s35, 4
        %s503 = ssub.s32 %s502, 1
        %p504 = scmp.gt.s32.totalorder %s503, 0
        %s505 = scalar_select %p504, %s503, 0
        %s506 = sadd.s32 %s35, 1
        %s507 = smul.u32 %s506, 4
        %p508 = scmp.lt.s32.totalorder %s507, 7
        %s509 = scalar_select %p508, %s507, 7
        %s510 = smul.u32 4, %s35
        %v512 = vld [vmem:[#allocation9] sm:$0xf]
        %v513 = vld [vmem:[#allocation9 + $0x4] sm:$0xf]
        %v514 = vld [vmem:[#allocation9 + $0x8] sm:$0xf]
        %v515 = vld [vmem:[#allocation9 + $0xc] sm:$0xf]
        %v516 = vld [vmem:[#allocation9 + $0x10] sm:$0xf]
        %v517 = vld [vmem:[#allocation9 + $0x14] sm:$0xf]
        %v518 = vld [vmem:[#allocation9 + $0x18] sm:$0xf]
        %v519 = vld [vmem:[#allocation9 + $0x1c] sm:$0xf]
        %v520 = vld [vmem:[#allocation9 + $0x20] sm:$0xf]
        %v521 = vld [vmem:[#allocation9 + $0x24] sm:$0xf]
        %v522 = vld [vmem:[#allocation9 + $0x28] sm:$0xf]
        %v523 = vld [vmem:[#allocation9 + $0x2c] sm:$0xf]
        %v524 = vld [vmem:[#allocation9 + $0x30] sm:$0xf]
        %v525 = vld [vmem:[#allocation9 + $0x34] sm:$0xf]
        %v526 = vld [vmem:[#allocation9 + $0x38] sm:$0xf]
        %v527 = vld [vmem:[#allocation9 + $0x3c] sm:$0xf]
        %v528 = vld [vmem:[%s4] sm:$0x1]
        %v529 = vld [vmem:[%s430] sm:$0xf]
        %v530 = vld [vmem:[%s430 + $0x4] sm:$0xf]
        %v531 = vld [vmem:[%s430 + $0x8] sm:$0xf]
        %v532 = vld [vmem:[%s430 + $0xc] sm:$0xf]
        %v534 = vlaneseq
        %v535 = vshrl.u32 %v534, 7
        %v536 = vsub.s32 0, %v535
        %v537 = vrot.slane %v528, %v536
        %v543 = vunpack.c.l.b16 %v529
        %v544 = vunpack.c.l.b16 %v530
        %v545 = vunpack.c.l.b16 %v531
        %v546 = vunpack.c.l.b16 %v532
        %v547 = vpack.c.b16 %v544, %v543
        %v548 = vpack.c.b16 %v546, %v545
        %v567 = vunpack.c.l.b16 %v512
        %v568 = vunpack.c.l.b16 %v513
        %v569 = vunpack.c.l.b16 %v514
        %v570 = vunpack.c.l.b16 %v515
        %v571 = vunpack.c.l.b16 %v516
        %v572 = vunpack.c.l.b16 %v517
        %v573 = vunpack.c.l.b16 %v518
        %v574 = vunpack.c.l.b16 %v519
        %v575 = vunpack.c.l.b16 %v520
        %v576 = vunpack.c.l.b16 %v521
        %v577 = vunpack.c.l.b16 %v522
        %v578 = vunpack.c.l.b16 %v523
        %v579 = vunpack.c.l.b16 %v524
        %v580 = vunpack.c.l.b16 %v525
        %v581 = vunpack.c.l.b16 %v526
        %v582 = vunpack.c.l.b16 %v527
        %v583 = vpack.c.b16 %v568, %v567
        %v584 = vpack.c.b16 %v570, %v569
        %v585 = vpack.c.b16 %v572, %v571
        %v586 = vpack.c.b16 %v574, %v573
        %v587 = vpack.c.b16 %v576, %v575
        %v588 = vpack.c.b16 %v578, %v577
        %v589 = vpack.c.b16 %v580, %v579
        %v590 = vpack.c.b16 %v582, %v581
        %599 = vmatprep.subr.bf16.mxu0 0
        %600 = vmatpush1.bf16.msra.mxu0 %v583
        %601 = vmatprep.subr.bf16.mxu0 0
        %602 = vmatpush1.bf16.msra.mxu0 %v584
        %603 = vmatprep.subr.bf16.mxu0 0
        %604 = vmatpush1.bf16.msra.mxu0 %v585
        %605 = vmatprep.subr.bf16.mxu0 0
        %606 = vmatpush1.bf16.msra.mxu0 %v586
        %607 = vmatprep.subr.bf16.mxu0 0
        %608 = vmatpush1.bf16.msra.mxu0 %v587
        %609 = vmatprep.subr.bf16.mxu0 0
        %610 = vmatpush1.bf16.msra.mxu0 %v588
        %611 = vmatprep.subr.bf16.mxu0 0
        %612 = vmatpush1.bf16.msra.mxu0 %v589
        %613 = vmatprep.subr.bf16.mxu0 0
        %614 = vmatpush1.bf16.msra.mxu0 %v590
        %615 = vmatprep.subr.bf16.mxu0 0
        %616 = vmatpush1.bf16.msra.mxu0 0
        %617 = vmatprep.subr.bf16.mxu0 0
        %618 = vmatpush1.bf16.msra.mxu0 0
        %619 = vmatprep.subr.bf16.mxu0 0
        %620 = vmatpush1.bf16.msra.mxu0 0
        %621 = vmatprep.subr.bf16.mxu0 0
        %622 = vmatpush1.bf16.msra.mxu0 0
        %623 = vmatprep.subr.bf16.mxu0 0
        %624 = vmatpush1.bf16.msra.mxu0 0
        %625 = vmatprep.subr.bf16.mxu0 0
        %626 = vmatpush1.bf16.msra.mxu0 0
        %627 = vmatprep.subr.bf16.mxu0 0
        %628 = vmatpush1.bf16.msra.mxu0 0
        %629 = vmatprep.subr.bf16.mxu0 0
        %630 = vmatpush1.bf16.msra.mxu0 0
        %631 = vmatprep.mubr.bf16.mxu0 0
        %632 = vmatmul.mubr.bf16.gmra.mrb[0].mxu0 %v547
        %v633 = vpop.f32.mrb[0].mxu0
        %v634 = vadd.f32 %v537, %v633
        %v635 = vpop.f32.mrb[0].mxu0
        %v636 = vpop.f32.mrb[0].mxu0
        %v637 = vadd.f32 %v537, %v636
        %v638 = vpop.f32.mrb[0].mxu0
        %639 = vmatprep.mubr.bf16.mxu0 0
        %640 = vmatmul.mubr.bf16.gmra.mrb[0].mxu0 %v548
        %v641 = vpop.f32.mrb[0].mxu0
        %v642 = vadd.f32 %v537, %v641
        %v643 = vpop.f32.mrb[0].mxu0
        %v644 = vpop.f32.mrb[0].mxu0
        %v645 = vadd.f32 %v537, %v644
        %v646 = vpop.f32.mrb[0].mxu0
        %647 = vdwg.mxu0
        %v648 = vld [vmem:[%s439] sm:$0xf]
        %649 = vmatprep.subr.bf16.mxu0 0
        %650 = vmatpush1.bf16.msra.mxu0 %v583
        %651 = vmatprep.subr.bf16.mxu0 0
        %652 = vmatpush1.bf16.msra.mxu0 %v584
        %653 = vmatprep.subr.bf16.mxu0 0
        %654 = vmatpush1.bf16.msra.mxu0 %v585
        %655 = vmatprep.subr.bf16.mxu0 0
        %656 = vmatpush1.bf16.msra.mxu0 %v586
        %657 = vmatprep.subr.bf16.mxu0 0
        %658 = vmatpush1.bf16.msra.mxu0 %v587
        %659 = vmatprep.subr.bf16.mxu0 0
        %660 = vmatpush1.bf16.msra.mxu0 %v588
        %661 = vmatprep.subr.bf16.mxu0 0
        %662 = vmatpush1.bf16.msra.mxu0 %v589
        %663 = vmatprep.subr.bf16.mxu0 0
        %664 = vmatpush1.bf16.msra.mxu0 %v590
        %665 = vmatprep.subr.bf16.mxu0 0
        %666 = vmatpush1.bf16.msra.mxu0 0
        %667 = vmatprep.subr.bf16.mxu0 0
        %668 = vmatpush1.bf16.msra.mxu0 0
        %669 = vmatprep.subr.bf16.mxu0 0
        %670 = vmatpush1.bf16.msra.mxu0 0
        %671 = vmatprep.subr.bf16.mxu0 0
        %672 = vmatpush1.bf16.msra.mxu0 0
        %673 = vmatprep.subr.bf16.mxu0 0
        %674 = vmatpush1.bf16.msra.mxu0 0
        %675 = vmatprep.subr.bf16.mxu0 0
        %676 = vmatpush1.bf16.msra.mxu0 0
        %677 = vmatprep.subr.bf16.mxu0 0
        %678 = vmatpush1.bf16.msra.mxu0 0
        %679 = vmatprep.subr.bf16.mxu0 0
        %680 = vmatpush1.bf16.msra.mxu0 0
        %681 = vmatprep.mubr.bf16.mxu0 0
        %682 = vmatmul.mubr.bf16.gmra.mrb[0].mxu0 %v648
        %v683 = vpop.f32.mrb[0].mxu0
        %v684 = vadd.f32 %v537, %v683
        %v685 = vpop.f32.mrb[0].mxu0
        %v686 = vpop.f32.mrb[0].mxu0
        %v687 = vpop.f32.mrb[0].mxu0
        %688 = vdwg.mxu0
        %v689 = vld [vmem:[%s448] sm:$0xf]
        %690 = vmatprep.subr.bf16.mxu0 0
        %691 = vmatpush1.bf16.msra.mxu0 %v583
        %692 = vmatprep.subr.bf16.mxu0 0
        %693 = vmatpush1.bf16.msra.mxu0 %v584
        %694 = vmatprep.subr.bf16.mxu0 0
        %695 = vmatpush1.bf16.msra.mxu0 %v585
        %696 = vmatprep.subr.bf16.mxu0 0
        %697 = vmatpush1.bf16.msra.mxu0 %v586
        %698 = vmatprep.subr.bf16.mxu0 0
        %699 = vmatpush1.bf16.msra.mxu0 %v587
        %700 = vmatprep.subr.bf16.mxu0 0
        %701 = vmatpush1.bf16.msra.mxu0 %v588
        %702 = vmatprep.subr.bf16.mxu0 0
        %703 = vmatpush1.bf16.msra.mxu0 %v589
        %704 = vmatprep.subr.bf16.mxu0 0
        %705 = vmatpush1.bf16.msra.mxu0 %v590
        %706 = vmatprep.subr.bf16.mxu0 0
        %707 = vmatpush1.bf16.msra.mxu0 0
        %708 = vmatprep.subr.bf16.mxu0 0
        %709 = vmatpush1.bf16.msra.mxu0 0
        %710 = vmatprep.subr.bf16.mxu0 0
        %711 = vmatpush1.bf16.msra.mxu0 0
        %712 = vmatprep.subr.bf16.mxu0 0
        %713 = vmatpush1.bf16.msra.mxu0 0
        %714 = vmatprep.subr.bf16.mxu0 0
        %715 = vmatpush1.bf16.msra.mxu0 0
        %716 = vmatprep.subr.bf16.mxu0 0
        %717 = vmatpush1.bf16.msra.mxu0 0
        %718 = vmatprep.subr.bf16.mxu0 0
        %719 = vmatpush1.bf16.msra.mxu0 0
        %720 = vmatprep.subr.bf16.mxu0 0
        %721 = vmatpush1.bf16.msra.mxu0 0
        %722 = vmatprep.mubr.bf16.mxu0 0
        %723 = vmatmul.mubr.bf16.gmra.mrb[0].mxu0 %v689
        %v724 = vpop.f32.mrb[0].mxu0
        %v725 = vadd.f32 %v537, %v724
        %v726 = vpop.f32.mrb[0].mxu0
        %v727 = vpop.f32.mrb[0].mxu0
        %v728 = vpop.f32.mrb[0].mxu0
        %729 = vdwg.mxu0
        %730 = vst [vmem:[#allocation2 + $0x8] sm:$0xff] %v684
        %731 = vst [vmem:[#allocation2 + $0x10] sm:$0xff] %v634
        %732 = vst [vmem:[#allocation2 + $0x18] sm:$0xff] %v637
        %733 = vst [vmem:[#allocation2 + $0x20] sm:$0xff] %v642
        %734 = vst [vmem:[#allocation2 + $0x28] sm:$0xff] %v645
        %735 = vst [vmem:[#allocation2 + $0x30] sm:$0xff] %v725
        %p736 = scmp.eq.s32.totalorder %s35, 0
        // Predicated region
        $region77: #{tpu_custom_call.1} parent=55 // pred_check
          %p737 = pneg %p736
        $region78: #{tpu_custom_call.1} parent=55 // pred_check_branch
          %739 = sbr.rel (%p737) target = $region80
        $region79: #{tpu_custom_call.1} parent=55 // pred_region
          %740 = vst [vmem:[#allocation2 + $0x8] sm:$0xff] 0.0
        $region80: #{tpu_custom_call.1} parent=55 // pred_fallthru
          _
        %p741 = scmp.eq.s32.totalorder %s35, 1
        // Predicated region
        $region81: #{tpu_custom_call.1} parent=55 // pred_check
          %p742 = pneg %p741
        $region82: #{tpu_custom_call.1} parent=55 // pred_check_branch
          %744 = sbr.rel (%p742) target = $region84
        $region83: #{tpu_custom_call.1} parent=55 // pred_region
          %745 = vst [vmem:[#allocation2 + $0x30] sm:$0xff] 0.0
        $region84: #{tpu_custom_call.1} parent=55 // pred_fallthru
          _
        %v746 = vlaneseq
        %v747 = vshrl.u32 %v746, 7
        %v748 = vadd.s32 %v747, 8
        %v749 = vadd.s32 %v747, 16
        %v750 = vadd.s32 %v747, 24
        %vm751 = vcmp.lt.s32.totalorder %v747, 0
        %v752 = vsub.s32 0, %v747
        %v753 = vsel %vm751, %v752, %v747
        %v754 = vshrl.u32 %v753, 3
        %v755 = vand.u32 %v753, 7
        %v756 = vsub.s32 0, %v755
        %v757 = vsel %vm751, %v756, %v755
        %vm758 = vcmp.lt.s32.totalorder %v748, 0
        %v759 = vsub.s32 0, %v748
        %v760 = vsel %vm758, %v759, %v748
        %v761 = vshrl.u32 %v760, 3
        %v762 = vand.u32 %v760, 7
        %v763 = vsub.s32 0, %v762
        %v764 = vsel %vm758, %v763, %v762
        %vm765 = vcmp.lt.s32.totalorder %v749, 0
        %v766 = vsub.s32 0, %v749
        %v767 = vsel %vm765, %v766, %v749
        %v768 = vshrl.u32 %v767, 3
        %v769 = vand.u32 %v767, 7
        %v770 = vsub.s32 0, %v769
        %v771 = vsel %vm765, %v770, %v769
        %vm772 = vcmp.lt.s32.totalorder %v750, 0
        %v773 = vsub.s32 0, %v750
        %v774 = vsel %vm772, %v773, %v750
        %v775 = vshrl.u32 %v774, 3
        %v776 = vand.u32 %v774, 7
        %v777 = vsub.s32 0, %v776
        %v778 = vsel %vm772, %v777, %v776
        %vm779 = vcmp.ne.s32.totalorder %v757, 0
        %vm780 = vcmp.ne.s32.totalorder %v764, 0
        %vm781 = vcmp.ne.s32.totalorder %v771, 0
        %vm782 = vcmp.ne.s32.totalorder %v778, 0
        %vm783 = vcmp.lt.s32.totalorder %v757, 0
        %vm784 = vcmp.lt.s32.totalorder %v764, 0
        %vm785 = vcmp.lt.s32.totalorder %v771, 0
        %vm786 = vcmp.lt.s32.totalorder %v778, 0
        %vm787 = vmand %vm783, %vm779
        %vm788 = vmand %vm784, %vm780
        %vm789 = vmand %vm785, %vm781
        %vm790 = vmand %vm786, %vm782
        %v791 = vadd.s32 %v757, 8
        %v792 = vadd.s32 %v764, 8
        %v793 = vadd.s32 %v771, 8
        %v794 = vadd.s32 %v778, 8
        %v795 = vsel %vm787, %v791, %v757
        %v796 = vsel %vm788, %v792, %v764
        %v797 = vsel %vm789, %v793, %v771
        %v798 = vsel %vm790, %v794, %v778
        %vm799 = vcmp.ne.s32.totalorder %v795, 0
        %vm800 = vcmp.ne.s32.totalorder %v796, 0
        %vm801 = vcmp.ne.s32.totalorder %v797, 0
        %vm802 = vcmp.ne.s32.totalorder %v798, 0
        %vm803 = vcmp.ne.s32.totalorder %v795, 7
        %vm804 = vcmp.ne.s32.totalorder %v796, 7
        %vm805 = vcmp.ne.s32.totalorder %v797, 7
        %vm806 = vcmp.ne.s32.totalorder %v798, 7
        %v807 = vld [vmem:[%s6] sm:$0x1]
        %v808 = vld [vmem:[#allocation2 + $0x8] sm:$0xff]
        %v809 = vld [vmem:[#allocation2 + $0x10] sm:$0xff]
        %v810 = vld [vmem:[#allocation2 + $0x18] sm:$0xff]
        %v811 = vld [vmem:[#allocation2 + $0x20] sm:$0xff]
        %v812 = vld [vmem:[%s5 + $0x1] sm:$0x1]
        %v813 = vlaneseq
        %v814 = vshrl.u32 %v813, 7
        %v815 = vsub.s32 0, %v814
        %v816 = vrot.slane %v812, %v815
        %v817 = vmul.f32 %v808, %v816
        %v818 = vmul.f32 %v809, %v816
        %v819 = vmul.f32 %v810, %v816
        %v820 = vmul.f32 %v811, %v816
        %v821 = vld [vmem:[#allocation2 + $0x28] sm:$0xff]
        %s822 = scalar_lea.vmem %s5, 4
        %v823 = vld [vmem:[%s822 + $0x1] sm:$0x1]
        %v824 = vlaneseq
        %v825 = vshrl.u32 %v824, 7
        %v826 = vsub.s32 0, %v825
        %v827 = vrot.slane %v823, %v826
        %v828 = vmul.f32 %v809, %v827
        %v829 = vmul.f32 %v810, %v827
        %v830 = vmul.f32 %v811, %v827
        %v831 = vmul.f32 %v821, %v827
        %v832 = vadd.f32 %v817, %v828
        %v833 = vadd.f32 %v818, %v829
        %v834 = vadd.f32 %v819, %v830
        %v835 = vadd.f32 %v820, %v831
        %v836 = vld [vmem:[#allocation2 + $0x30] sm:$0xff]
        %s837 = scalar_lea.vmem %s5, 8
        %v838 = vld [vmem:[%s837 + $0x1] sm:$0x1]
        %v839 = vlaneseq
        %v840 = vshrl.u32 %v839, 7
        %v841 = vsub.s32 0, %v840
        %v842 = vrot.slane %v838, %v841
        %v843 = vmul.f32 %v810, %v842
        %v844 = vmul.f32 %v811, %v842
        %v845 = vmul.f32 %v821, %v842
        %v846 = vmul.f32 %v836, %v842
        %v847 = vadd.f32 %v832, %v843
        %v848 = vadd.f32 %v833, %v844
        %v849 = vadd.f32 %v834, %v845
        %v850 = vadd.f32 %v835, %v846
        %v852 = vlaneseq
        %v853 = vshrl.u32 %v852, 7
        %v854 = vsub.s32 0, %v853
        %v855 = vrot.slane %v807, %v854
        %v857 = vadd.f32 %v855, %v847
        %v858 = vadd.f32 %v855, %v848
        %v859 = vadd.f32 %v855, %v849
        %v860 = vadd.f32 %v855, %v850
        %v861 = vld [vmem:[#allocation2 + $0x9] sm:$0xff]
        %v862 = vld [vmem:[#allocation2 + $0x11] sm:$0xff]
        %v863 = vld [vmem:[#allocation2 + $0x19] sm:$0xff]
        %v864 = vld [vmem:[#allocation2 + $0x21] sm:$0xff]
        %v865 = vld [vmem:[%s5 + $0x2] sm:$0x1]
        %v866 = vlaneseq
        %v867 = vshrl.u32 %v866, 7
        %v868 = vsub.s32 0, %v867
        %v869 = vrot.slane %v865, %v868
        %v870 = vmul.f32 %v861, %v869
        %v871 = vmul.f32 %v862, %v869
        %v872 = vmul.f32 %v863, %v869
        %v873 = vmul.f32 %v864, %v869
        %v874 = vld [vmem:[#allocation2 + $0x29] sm:$0xff]
        %v875 = vld [vmem:[%s822 + $0x2] sm:$0x1]
        %v876 = vlaneseq
        %v877 = vshrl.u32 %v876, 7
        %v878 = vsub.s32 0, %v877
        %v879 = vrot.slane %v875, %v878
        %v880 = vmul.f32 %v862, %v879
        %v881 = vmul.f32 %v863, %v879
        %v882 = vmul.f32 %v864, %v879
        %v883 = vmul.f32 %v874, %v879
        %v884 = vadd.f32 %v870, %v880
        %v885 = vadd.f32 %v871, %v881
        %v886 = vadd.f32 %v872, %v882
        %v887 = vadd.f32 %v873, %v883
        %v888 = vld [vmem:[#allocation2 + $0x31] sm:$0xff]
        %v889 = vld [vmem:[%s837 + $0x2] sm:$0x1]
        %v890 = vlaneseq
        %v891 = vshrl.u32 %v890, 7
        %v892 = vsub.s32 0, %v891
        %v893 = vrot.slane %v889, %v892
        %v894 = vmul.f32 %v863, %v893
        %v895 = vmul.f32 %v864, %v893
        %v896 = vmul.f32 %v874, %v893
        %v897 = vmul.f32 %v888, %v893
        %v898 = vadd.f32 %v884, %v894
        %v899 = vadd.f32 %v885, %v895
        %v900 = vadd.f32 %v886, %v896
        %v901 = vadd.f32 %v887, %v897
        %v902 = vld [vmem:[#allocation2 + $0x7] sm:$0xff]
        %v903 = vld [vmem:[#allocation2 + $0xf] sm:$0xff]
        %v904 = vld [vmem:[#allocation2 + $0x17] sm:$0xff]
        %v905 = vld [vmem:[#allocation2 + $0x1f] sm:$0xff]
        %v906 = vld [vmem:[%s5] sm:$0x1]
        %v907 = vlaneseq
        %v908 = vshrl.u32 %v907, 7
        %v909 = vsub.s32 0, %v908
        %v910 = vrot.slane %v906, %v909
        %v911 = vmul.f32 %v902, %v910
        %v912 = vmul.f32 %v903, %v910
        %v913 = vmul.f32 %v904, %v910
        %v914 = vmul.f32 %v905, %v910
        %v915 = vld [vmem:[#allocation2 + $0x27] sm:$0xff]
        %v916 = vld [vmem:[%s822] sm:$0x1]
        %v917 = vlaneseq
        %v918 = vshrl.u32 %v917, 7
        %v919 = vsub.s32 0, %v918
        %v920 = vrot.slane %v916, %v919
        %v921 = vmul.f32 %v903, %v920
        %v922 = vmul.f32 %v904, %v920
        %v923 = vmul.f32 %v905, %v920
        %v924 = vmul.f32 %v915, %v920
        %v925 = vadd.f32 %v911, %v921
        %v926 = vadd.f32 %v912, %v922
        %v927 = vadd.f32 %v913, %v923
        %v928 = vadd.f32 %v914, %v924
        %v929 = vld [vmem:[#allocation2 + $0x2f] sm:$0xff]
        %v930 = vld [vmem:[%s837] sm:$0x1]
        %v931 = vlaneseq
        %v932 = vshrl.u32 %v931, 7
        %v933 = vsub.s32 0, %v932
        %v934 = vrot.slane %v930, %v933
        %v935 = vmul.f32 %v904, %v934
        %v936 = vmul.f32 %v905, %v934
        %v937 = vmul.f32 %v915, %v934
        %v938 = vmul.f32 %v929, %v934
        %v939 = vadd.f32 %v925, %v935
        %v940 = vadd.f32 %v926, %v936
        %v941 = vadd.f32 %v927, %v937
        %v942 = vadd.f32 %v928, %v938
        %v943 = vsel %vm803, 1, 0
        %v944 = vsel %vm804, 1, 0
        %v945 = vsel %vm805, 1, 0
        %v946 = vsel %vm806, 1, 0
        %vm947 = vcmp.eq.s32.totalorder %v943, 1
        %vm948 = vcmp.eq.s32.totalorder %v944, 1
        %vm949 = vcmp.eq.s32.totalorder %v945, 1
        %vm950 = vcmp.eq.s32.totalorder %v946, 1
        %v951 = vsel %vm947, %v898, 0.0
        %v952 = vsel %vm948, %v899, 0.0
        %v953 = vsel %vm949, %v900, 0.0
        %v954 = vsel %vm950, %v901, 0.0
        %v955 = vadd.f32 %v857, %v951
        %v956 = vadd.f32 %v858, %v952
        %v957 = vadd.f32 %v859, %v953
        %v958 = vadd.f32 %v860, %v954
        %v959 = vsel %vm799, 1, 0
        %v960 = vsel %vm800, 1, 0
        %v961 = vsel %vm801, 1, 0
        %v962 = vsel %vm802, 1, 0
        %vm963 = vcmp.eq.s32.totalorder %v959, 1
        %vm964 = vcmp.eq.s32.totalorder %v960, 1
        %vm965 = vcmp.eq.s32.totalorder %v961, 1
        %vm966 = vcmp.eq.s32.totalorder %v962, 1
        %v967 = vsel %vm963, %v939, 0.0
        %v968 = vsel %vm964, %v940, 0.0
        %v969 = vsel %vm965, %v941, 0.0
        %v970 = vsel %vm966, %v942, 0.0
        %v971 = vadd.f32 %v955, %v967
        %v972 = vadd.f32 %v956, %v968
        %v973 = vadd.f32 %v957, %v969
        %v974 = vadd.f32 %v958, %v970
        %v975 = vmul.f32 %v971, 0.5
        %v976 = vmul.f32 %v972, 0.5
        %v977 = vmul.f32 %v973, 0.5
        %v978 = vmul.f32 %v974, 0.5
        %v979 = vmul.f32 %v971, 0.70710677
        %v980 = vmul.f32 %v972, 0.70710677
        %v981 = vmul.f32 %v973, 0.70710677
        %v982 = vmul.f32 %v974, 0.70710677
        %v983 = verf.f32.pop %v979
        %v984 = verf.f32.pop %v980
        %v985 = verf.f32.pop %v981
        %v986 = verf.f32.pop %v982
        %v987 = vadd.f32 %v983, 1.0
        %v988 = vadd.f32 %v984, 1.0
        %v989 = vadd.f32 %v985, 1.0
        %v990 = vadd.f32 %v986, 1.0
        %v991 = vmul.f32 %v975, %v987
        %v992 = vmul.f32 %v976, %v988
        %v993 = vmul.f32 %v977, %v989
        %v994 = vmul.f32 %v978, %v990
        %v995 = vpack.c.bf16 %v992, %v991
        %v996 = vpack.c.bf16 %v994, %v993
        %v997 = vld [vmem:[#allocation11] sm:$0xf]
        %v998 = vld [vmem:[#allocation11 + $0x4] sm:$0xf]
        %v999 = vld [vmem:[#allocation11 + $0x8] sm:$0xf]
        %v1000 = vld [vmem:[#allocation11 + $0xc] sm:$0xf]
        %v1001 = vld [vmem:[#allocation11 + $0x10] sm:$0xf]
        %v1002 = vld [vmem:[#allocation11 + $0x14] sm:$0xf]
        %v1003 = vld [vmem:[#allocation11 + $0x18] sm:$0xf]
        %v1004 = vld [vmem:[#allocation11 + $0x1c] sm:$0xf]
        %v1005 = vld [vmem:[#allocation11 + $0x20] sm:$0xf]
        %v1006 = vld [vmem:[#allocation11 + $0x24] sm:$0xf]
        %v1007 = vld [vmem:[#allocation11 + $0x28] sm:$0xf]
        %v1008 = vld [vmem:[#allocation11 + $0x2c] sm:$0xf]
        %v1009 = vld [vmem:[#allocation11 + $0x30] sm:$0xf]
        %v1010 = vld [vmem:[#allocation11 + $0x34] sm:$0xf]
        %v1011 = vld [vmem:[#allocation11 + $0x38] sm:$0xf]
        %v1012 = vld [vmem:[#allocation11 + $0x3c] sm:$0xf]
        %v1013 = vld [vmem:[%s8] sm:$0x1]
        %v1015 = vlaneseq
        %v1016 = vshrl.u32 %v1015, 7
        %v1017 = vsub.s32 0, %v1016
        %v1018 = vrot.slane %v1013, %v1017
        %v1036 = vunpack.c.l.b16 %v997
        %v1037 = vunpack.c.l.b16 %v998
        %v1038 = vunpack.c.l.b16 %v999
        %v1039 = vunpack.c.l.b16 %v1000
        %v1040 = vunpack.c.l.b16 %v1001
        %v1041 = vunpack.c.l.b16 %v1002
        %v1042 = vunpack.c.l.b16 %v1003
        %v1043 = vunpack.c.l.b16 %v1004
        %v1044 = vunpack.c.l.b16 %v1005
        %v1045 = vunpack.c.l.b16 %v1006
        %v1046 = vunpack.c.l.b16 %v1007
        %v1047 = vunpack.c.l.b16 %v1008
        %v1048 = vunpack.c.l.b16 %v1009
        %v1049 = vunpack.c.l.b16 %v1010
        %v1050 = vunpack.c.l.b16 %v1011
        %v1051 = vunpack.c.l.b16 %v1012
        %v1052 = vpack.c.b16 %v1037, %v1036
        %v1053 = vpack.c.b16 %v1039, %v1038
        %v1054 = vpack.c.b16 %v1041, %v1040
        %v1055 = vpack.c.b16 %v1043, %v1042
        %v1056 = vpack.c.b16 %v1045, %v1044
        %v1057 = vpack.c.b16 %v1047, %v1046
        %v1058 = vpack.c.b16 %v1049, %v1048
        %v1059 = vpack.c.b16 %v1051, %v1050
        %1068 = vmatprep.subr.bf16.mxu0 0
        %1069 = vmatpush1.bf16.msra.mxu0 %v1052
        %1070 = vmatprep.subr.bf16.mxu0 0
        %1071 = vmatpush1.bf16.msra.mxu0 %v1053
        %1072 = vmatprep.subr.bf16.mxu0 0
        %1073 = vmatpush1.bf16.msra.mxu0 %v1054
        %1074 = vmatprep.subr.bf16.mxu0 0
        %1075 = vmatpush1.bf16.msra.mxu0 %v1055
        %1076 = vmatprep.subr.bf16.mxu0 0
        %1077 = vmatpush1.bf16.msra.mxu0 %v1056
        %1078 = vmatprep.subr.bf16.mxu0 0
        %1079 = vmatpush1.bf16.msra.mxu0 %v1057
        %1080 = vmatprep.subr.bf16.mxu0 0
        %1081 = vmatpush1.bf16.msra.mxu0 %v1058
        %1082 = vmatprep.subr.bf16.mxu0 0
        %1083 = vmatpush1.bf16.msra.mxu0 %v1059
        %1084 = vmatprep.subr.bf16.mxu0 0
        %1085 = vmatpush1.bf16.msra.mxu0 0
        %1086 = vmatprep.subr.bf16.mxu0 0
        %1087 = vmatpush1.bf16.msra.mxu0 0
        %1088 = vmatprep.subr.bf16.mxu0 0
        %1089 = vmatpush1.bf16.msra.mxu0 0
        %1090 = vmatprep.subr.bf16.mxu0 0
        %1091 = vmatpush1.bf16.msra.mxu0 0
        %1092 = vmatprep.subr.bf16.mxu0 0
        %1093 = vmatpush1.bf16.msra.mxu0 0
        %1094 = vmatprep.subr.bf16.mxu0 0
        %1095 = vmatpush1.bf16.msra.mxu0 0
        %1096 = vmatprep.subr.bf16.mxu0 0
        %1097 = vmatpush1.bf16.msra.mxu0 0
        %1098 = vmatprep.subr.bf16.mxu0 0
        %1099 = vmatpush1.bf16.msra.mxu0 0
        %1100 = vmatprep.mubr.bf16.mxu0 0
        %1101 = vmatmul.mubr.bf16.gmra.mrb[0].mxu0 %v995
        %v1102 = vpop.f32.mrb[0].mxu0
        %v1103 = vadd.f32 %v1018, %v1102
        %v1104 = vpop.f32.mrb[0].mxu0
        %v1105 = vpop.f32.mrb[0].mxu0
        %v1106 = vadd.f32 %v1018, %v1105
        %v1107 = vpop.f32.mrb[0].mxu0
        %1108 = vmatprep.mubr.bf16.mxu0 0
        %1109 = vmatmul.mubr.bf16.gmra.mrb[0].mxu0 %v996
        %v1110 = vpop.f32.mrb[0].mxu0
        %v1111 = vadd.f32 %v1018, %v1110
        %v1112 = vpop.f32.mrb[0].mxu0
        %v1113 = vpop.f32.mrb[0].mxu0
        %v1114 = vadd.f32 %v1018, %v1113
        %v1115 = vpop.f32.mrb[0].mxu0
        %1116 = vdwg.mxu0
        %1117 = vst [vmem:[%s500] sm:$0xff] %v1103
        %1118 = vst [vmem:[%s500 + $0x8] sm:$0xff] %v1106
        %1119 = vst [vmem:[%s500 + $0x10] sm:$0xff] %v1111
        %1120 = vst [vmem:[%s500 + $0x18] sm:$0xff] %v1114
        %s1121 = sand.u32 %s278, 1
        %s1122 = scalar_lea.sflag [#allocation5], %s1121
        %s1123 = sand.u32 %s278, 1
        %s1124 = smul.addr %s1123, 32
        %s1125 = scalar_lea.vmem [#allocation12], %s1124
        // Predicated region
        $region85: #{tpu_custom_call.1} parent=55 // pred_check
          %p1126 = pneg %p288
        $region86: #{tpu_custom_call.1} parent=55 // pred_check_branch
          %1128 = sbr.rel (%p1126) target = $region88
        $region87: #{tpu_custom_call.1} parent=55 // pred_region
          %s1129 = smul.u32 4, %s35
          %s1131 = ssub.s32 512, 512
          %1132 = vsyncadd %s1122, %s1131
          %s1133 = smul.addr %s34, 8
          %s1134 = sadd.s32 %s1129, %s1133
          %s1135 = smul.addr %s1134, 128
          %s1136 = scalar_lea.hbm %s9, %s1135
          %s1137 = sshll.u32 %s1125, 4
          %s1138 = int_to_ptr.vmem [resolvable:$true] %s1137
          %1143 = dma.vmem_to_hbm [thread:$0]  %s1138, 512, %s1136, %s1122, 128, 128, 8
        $region88: #{tpu_custom_call.1} parent=55 // pred_fallthru
          _
      $region56: #{tpu_custom_call.1} parent=5 // pred_fallthru
        _
      %p1144 = scmp.le.s32.totalorder 2, %s25
      // Predicated region
      $region89: #{tpu_custom_call.1} parent=5 // pred_check
        %p1145 = pneg %p1144
      $region90: #{tpu_custom_call.1} parent=5 // pred_check_branch
        %1147 = sbr.rel (%p1145) target = $region92
      $region91: #{tpu_custom_call.1} parent=5 // pred_region
        %s1148 = ssub.s32 %s25, 2
        // Predicated region
        $region93: #{tpu_custom_call.1} parent=91 // pred_check
          %p1149 = pneg %p294
        $region94: #{tpu_custom_call.1} parent=91 // pred_check_branch
          %1151 = sbr.rel (%p1149) target = $region96
        $region95: #{tpu_custom_call.1} parent=91 // pred_region
          %s1152 = sand.u32 %s279, 1
          %s1153 = scalar_lea.sflag [#allocation5], %s1152
          %s1154 = sand.u32 %s279, 1
          %s1155 = smul.addr %s1154, 32
          %s1156 = scalar_lea.vmem [#allocation12], %s1155
          %1157 = dma.done %s1153, 512
        $region96: #{tpu_custom_call.1} parent=91 // pred_fallthru
          _
      $region92: #{tpu_custom_call.1} parent=5 // pred_fallthru
        _
    $region6: #{tpu_custom_call.1} parent=1 // loop_footer
      %s29 = sadd.s32 1, %s25
    $region7: #{tpu_custom_call.1} parent=1 // loop_footer_branch
      %24 = sbr.rel target = $region3
    $region8: #{tpu_custom_call.1} parent=1 // loop_exit
      _
    %1158 = vsyncpa [#allocation4], 1
    %s1159 = scalar_lea.sflag [#allocation4], 1
    %1160 = vsyncpa %s1159, 1
    %1161 = vsyncpa [#allocation7], 1
    %s1162 = scalar_lea.sflag [#allocation7], 1
    %1163 = vsyncpa %s1162, 1
    %1164 = vsyncpa [#allocation10], 1
    %1165 = vsyncpa [#allocation5], 1
    %s1166 = scalar_lea.sflag [#allocation5], 1
    %1167 = vsyncpa %s1166, 1

</llo_original>
